<compile_context>
chip_gen: v6e
topology: v6e:2x2x1
jax: 0.10.0
libtpu: 0.0.40
codegen_flags: <defaults>
</compile_context>

<pallas_src>
import functools

import jax
import jax.numpy as jnp
from jax.experimental import pallas as pl
from jax.experimental.pallas import tpu as pltpu


# ----------------------------------------------------------------------------
# Small helpers
# ----------------------------------------------------------------------------
def _round_up(x, m):
    return ((x + m - 1) // m) * m


def _pick_tile(total, requested, mult=128):
    """Largest multiple of `mult` that divides `total` and is <= requested."""
    best = mult
    t = mult
    cap = min(requested, total)
    while t <= cap:
        if total % t == 0:
            best = t
        t += mult
    return best


def _vmem_capacity_bytes():
    """Physical VMEM per core (generation-aware); conservative fallback = 64 MiB (v7x)."""
    try:
        cap = getattr(pltpu.get_tpu_info(), "vmem_capacity_bytes", None)
        if cap:
            return int(cap)
    except Exception:
        pass
    return 64 * 1024 * 1024


def _vmem_limit(needed_bytes, cap):
    return int(min(0.9 * cap, max(needed_bytes + (2 << 20), 32 << 20)))


def _const_spec(block_shape, index_map, single_buffer):
    """BlockSpec for a grid-constant block; single-buffered to halve its VMEM footprint."""
    if single_buffer:
        return pl.BlockSpec(block_shape, index_map, pipeline_mode=pl.Buffered(1))
    return pl.BlockSpec(block_shape, index_map)


def _pad2(x, rows, cols):
    r, c = x.shape
    if r == rows and c == cols:
        return x
    return jnp.pad(x, ((0, rows - r), (0, cols - c)))


def _quantize_rows_int8(a):
    """Per-row symmetric int8 quantization of A_hat: a ~= q * scale (scale per row)."""
    amax = jnp.max(jnp.abs(a), axis=1, keepdims=True)
    scale = jnp.where(amax > 0, amax / 127.0, 1.0).astype(jnp.float32)
    q = jnp.clip(jnp.round(a / scale), -127.0, 127.0).astype(jnp.int8)
    return q, scale


def _fused_vmem_bytes(n, dp, itemsize):
    a = n * n * itemsize                    # constant block, single-buffered
    e0 = n * dp * 4                         # constant block, single-buffered
    w = 2 * (2 * dp * dp * itemsize)        # per-layer weights, double-buffered
    bias = 2 * dp * 4
    out = 2 * n * dp * 4                    # resident state (+ margin)
    sp = n * 2 * dp * itemsize              # scratch
    temps = 4 * n * dp * 4                  # ae / s / p f32 intermediates
    return a + e0 + w + bias + out + sp + temps + (2 << 20)


def _tiled_vmem_bytes(tm, tk, dp, a_itemsize):
    a = 2 * tm * tk * a_itemsize
    misc = 2 * tm * 4 + 2 * dp * 4
    h = 2 * tm * dp * 4
    e = 2 * tk * dp * 2
    w = 2 * (2 * dp * dp * 2)
    outs = 2 * (tm * dp * 4 + tm * dp * 2)
    scr = tm * dp * 4 + tm * 2 * dp * 2
    return a + misc + h + e + w + outs + scr + (2 << 20)


# ----------------------------------------------------------------------------
# Fused multi-layer kernel (whole graph resident in VMEM, grid = layers)
# ----------------------------------------------------------------------------
def _ngcf_fused_kernel(a_ref, e0_ref, w_ref, b_ref, out_ref, sp_ref, *, negative_slope):
    """One grid step == one NGCF layer; H lives in the resident out block.

    a_ref  : (N, N)       bf16 normalized adjacency   (constant, single-buffered)
    e0_ref : (N, Dp)      f32 padded input features   (constant, single-buffered)
    w_ref  : (1, 2Dp, Dp) bf16 stacked [W1; W2] for this layer
    b_ref  : (1, 1, Dp)   f32 (b1 + b2) for this layer
    out_ref: (N, Dp)      f32 hidden state / output   (resident across layers)
    sp_ref : (N, 2Dp)     bf16 scratch holding [H+AE | AE*H]
    """
    l = pl.program_id(0)
    n_layers = pl.num_programs(0)
    dp = out_ref.shape[-1]

    @pl.when(l == 0)
    def _():
        out_ref[...] = e0_ref[...]

    h = out_ref[...]                                   # f32 state
    ae = jnp.dot(a_ref[...], h.astype(a_ref.dtype),
                 preferred_element_type=jnp.float32)

    # Stage both matmul operands in one persistent bf16 scratch so the two weight
    # matmuls run as a single MXU dot with contraction K = 2*Dp (no concat temp).
    sp_ref[:, :dp] = (h + ae).astype(sp_ref.dtype)     # W1 branch: self + aggregated
    sp_ref[:, dp:] = (ae * h).astype(sp_ref.dtype)     # W2 branch: bilinear interaction

    out = jnp.dot(sp_ref[...], w_ref[0], preferred_element_type=jnp.float32) + b_ref[0]

    @pl.when(l != n_layers - 1)                        # LeakyReLU on all but the last layer
    def _():
        out_ref[...] = jnp.where(out > 0, out, negative_slope * out)

    @pl.when(l == n_layers - 1)
    def _():
        out_ref[...] = out


def _ngcf_fused_call(a_c, e0, w12_c, b, negative_slope, *, single_buffer, vmem_limit):
    n_layers = w12_c.shape[0]
    n, dp = e0.shape
    kernel = functools.partial(_ngcf_fused_kernel, negative_slope=negative_slope)
    return pl.pallas_call(
        kernel,
        out_shape=jax.ShapeDtypeStruct((n, dp), jnp.float32),
        grid_spec=pltpu.PrefetchScalarGridSpec(
            num_scalar_prefetch=0,
            grid=(n_layers,),
            in_specs=[
                _const_spec((n, n), lambda l: (0, 0), single_buffer),       # A_hat
                _const_spec((n, dp), lambda l: (0, 0), single_buffer),      # E0
                pl.BlockSpec((1, 2 * dp, dp), lambda l: (l, 0, 0)),         # stacked W
                pl.BlockSpec((1, 1, dp), lambda l: (l, 0, 0)),              # summed bias
            ],
            out_specs=pl.BlockSpec((n, dp), lambda l: (0, 0)),              # resident H
            scratch_shapes=[pltpu.VMEM((n, 2 * dp), a_c.dtype)],
        ),
        compiler_params=pltpu.CompilerParams(
            dimension_semantics=("arbitrary",),          # layers are sequential
            vmem_limit_bytes=vmem_limit),
    )(a_c, e0, w12_c, b)


# ----------------------------------------------------------------------------
# Tiled per-layer kernel (row tiles x neighbour tiles, VMEM bounded in N)
# ----------------------------------------------------------------------------
def _ngcf_layer_kernel(a_ref, sc_ref, h_ref, e_ref, w_ref, b_ref,
                       of_ref, ob_ref, acc_ref, sp_ref, *, apply_act, negative_slope):
    """One NGCF layer, row tile i x neighbour tile k (k innermost, accumulating).

    a_ref : (TM, TK)  int8 (or bf16) adjacency tile for rows i, neighbours k
    sc_ref: (TM, 1)   f32 per-row dequant scale of A
    h_ref : (TM, Dp)  f32 self-feature rows
    e_ref : (TK, Dp)  bf16 neighbour feature rows
    w_ref : (2Dp, Dp) bf16 stacked [W1; W2]    (constant, single-buffered)
    b_ref : (1, Dp)   f32 b1 + b2              (constant, single-buffered)
    of_ref: (TM, Dp)  f32 output rows (next layer's self features)
    ob_ref: (TM, Dp)  bf16 output rows (next layer's neighbour table; no host-side cast)
    acc_ref: (TM, Dp) f32 accumulator for A @ E over the neighbour axis
    sp_ref : (TM, 2Dp) bf16 scratch holding [H+AE | AE*H]
    """
    k = pl.program_id(1)

    @pl.when(k == 0)
    def _():
        acc_ref[...] = jnp.zeros_like(acc_ref)

    # int8 -> bf16 dequant on the VPU (exact for |q| <= 127); works on every generation,
    # v7x included (no integer MXU path there). Row scales are applied once at k == last.
    a_bf = a_ref[...].astype(jnp.float32).astype(e_ref.dtype)
    acc_ref[...] += jnp.dot(a_bf, e_ref[...], preferred_element_type=jnp.float32)

    @pl.when(k == pl.num_programs(1) - 1)
    def _():
        dp = of_ref.shape[-1]
        ae = acc_ref[...] * sc_ref[...]
        h = h_ref[...]
        sp_ref[:, :dp] = (h + ae).astype(sp_ref.dtype)
        sp_ref[:, dp:] = (ae * h).astype(sp_ref.dtype)
        out = (jnp.dot(sp_ref[...], w_ref[...], preferred_element_type=jnp.float32)
               + b_ref[...])
        if apply_act:
            out = jnp.where(out > 0, out, negative_slope * out)
        of_ref[...] = out
        ob_ref[...] = out.astype(ob_ref.dtype)


def _ngcf_layer_call(a_q, a_scale, h_f32, h_bf, w12_l, b_l, *, apply_act, tm, tk,
                     negative_slope, single_buffer, vmem_limit):
    n, dp = h_f32.shape
    kernel = functools.partial(_ngcf_layer_kernel, apply_act=apply_act,
                               negative_slope=negative_slope)
    return pl.pallas_call(
        kernel,
        out_shape=(jax.ShapeDtypeStruct((n, dp), jnp.float32),
                   jax.ShapeDtypeStruct((n, dp), h_bf.dtype)),
        grid_spec=pltpu.PrefetchScalarGridSpec(
            num_scalar_prefetch=0,
            grid=(n // tm, n // tk),                           # neighbour (k) axis last
            in_specs=[
                pl.BlockSpec((tm, tk), lambda i, k: (i, k)),   # adjacency tile (int8)
                pl.BlockSpec((tm, 1), lambda i, k: (i, 0)),    # per-row dequant scale
                pl.BlockSpec((tm, dp), lambda i, k: (i, 0)),   # self rows (f32)
                pl.BlockSpec((tk, dp), lambda i, k: (k, 0)),   # neighbour rows (bf16)
                _const_spec((2 * dp, dp), lambda i, k: (0, 0), single_buffer),
                _const_spec((1, dp), lambda i, k: (0, 0), single_buffer),
            ],
            out_specs=[
                pl.BlockSpec((tm, dp), lambda i, k: (i, 0)),
                pl.BlockSpec((tm, dp), lambda i, k: (i, 0)),
            ],
            scratch_shapes=[pltpu.VMEM((tm, dp), jnp.float32),
                            pltpu.VMEM((tm, 2 * dp), h_bf.dtype)],
        ),
        compiler_params=pltpu.CompilerParams(
            dimension_semantics=("parallel", "arbitrary"),
            vmem_limit_bytes=vmem_limit),
    )(a_q, a_scale, h_f32, h_bf, w12_l, b_l)


# ----------------------------------------------------------------------------
# Host-side packing / wrapper
# ----------------------------------------------------------------------------
def _pack_layer_params(params, dp):
    """Stack [W1; W2] -> (2Dp, Dp), pre-sum biases -> (1, Dp); zero-pad to Dp lanes."""
    w12s, bs = [], []
    for (w1, b1, w2, b2) in params:
        d = w1.shape[0]
        w1p = jnp.zeros((dp, dp), jnp.float32).at[:d, :d].set(w1)
        w2p = jnp.zeros((dp, dp), jnp.float32).at[:d, :d].set(w2)
        w12s.append(jnp.concatenate([w1p, w2p], axis=0))
        bs.append(jnp.zeros((1, dp), jnp.float32).at[:, :d].set(b1 + b2))
    return jnp.stack(w12s), jnp.stack(bs)        # (L, 2Dp, Dp), (L, 1, Dp)


_SINGLE_BUFFER_OK = True   # flipped to False if pl.Buffered(1) is unsupported here


def ngcf_gcn_forward(a_hat, features, params, *, negative_slope=0.2,
                     compute_dtype=jnp.bfloat16, lane_pad=128,
                     tm=256, tk=1024, use_fused=None, quantize_adjacency=True):
    """NGCF_GCN.forward (eval mode: inter-layer dropout = identity)."""
    global _SINGLE_BUFFER_OK
    n, d = features.shape
    n_layers = len(params)
    dp = _round_up(d, lane_pad)

    w12, b = _pack_layer_params(params, dp)
    w12_c = w12.astype(compute_dtype)

    cap = _vmem_capacity_bytes()
    itemsize = jnp.dtype(compute_dtype).itemsize
    nf = _round_up(n, 8)
    fused_bytes = _fused_vmem_bytes(nf, dp, itemsize)
    if use_fused is None:
        # Generation-aware budget (v5e/v6e: 128 MiB, v7x: 64 MiB physical VMEM).
        use_fused = fused_bytes <= int(0.7 * cap)

    def _run(single_buffer):
        if use_fused:
            a_p = _pad2(a_hat, nf, nf).astype(compute_dtype)
            e0 = _pad2(features.astype(jnp.float32), nf, dp)
            return _ngcf_fused_call(a_p, e0, w12_c, b, negative_slope,
                                    single_buffer=single_buffer,
                                    vmem_limit=_vmem_limit(fused_bytes, cap))

        np_ = _round_up(n, 128)
        tm_ = _pick_tile(np_, tm)
        tk_ = _pick_tile(np_, tk)
        a_p = _pad2(a_hat.astype(jnp.float32), np_, np_)
        if quantize_adjacency:
            a_q, a_scale = _quantize_rows_int8(a_p)   # halves A_hat HBM traffic
        else:
            a_q = a_p.astype(compute_dtype)
            a_scale = jnp.ones((np_, 1), jnp.float32)
        vlim = _vmem_limit(
            _tiled_vmem_bytes(tm_, tk_, dp, jnp.dtype(a_q.dtype).itemsize), cap)
        h32 = _pad2(features.astype(jnp.float32), np_, dp)
        hbf = h32.astype(compute_dtype)     # one-time cast; later layers emit it as output
        for i in range(n_layers):
            h32, hbf = _ngcf_layer_call(
                a_q, a_scale, h32, hbf, w12_c[i], b[i],
                apply_act=(i != n_layers - 1), tm=tm_, tk=tk_,
                negative_slope=negative_slope,
                single_buffer=single_buffer, vmem_limit=vlim)
        return h32

    if _SINGLE_BUFFER_OK:
        try:
            return _run(True)[:n, :d]
        except Exception:
            _SINGLE_BUFFER_OK = False   # pl.Buffered(1) unsupported; use default buffering
    return _run(False)[:n, :d]


# ----------------------------------------------------------------------------
# Pure-JAX reference (mirrors the kernel's quantization / accumulation dtypes)
# ----------------------------------------------------------------------------
def _reference_forward(a_hat, features, params, *, negative_slope=0.2,
                       compute_dtype=jnp.bfloat16, int8_a=False):
    if int8_a:
        q, scale = _quantize_rows_int8(a_hat.astype(jnp.float32))
        a_c = q.astype(jnp.float32).astype(compute_dtype)
    else:
        a_c = a_hat.astype(compute_dtype)
        scale = None
    h = features.astype(jnp.float32)
    n_layers = len(params)
    for i, (w1, b1, w2, b2) in enumerate(params):
        ae = jnp.dot(a_c, h.astype(compute_dtype), preferred_element_type=jnp.float32)
        if scale is not None:
            ae = ae * scale
        s = h + ae
        p = ae * h
        w12 = jnp.concatenate([w1, w2], axis=0).astype(compute_dtype)
        sp = jnp.concatenate([s, p], axis=-1).astype(compute_dtype)
        out = jnp.dot(sp, w12, preferred_element_type=jnp.float32) + (b1 + b2)
        if i != n_layers - 1:
            out = jnp.where(out > 0, out, negative_slope * out)
        h = out
    return h


# ----------------------------------------------------------------------------
# Deterministic example inputs
# ----------------------------------------------------------------------------
def make_params(key, dim_emb, n_layers):
    params = []
    for _ in range(n_layers):
        k1, k2, key = jax.random.split(key, 3)
        scale = (2.0 / (dim_emb + dim_emb)) ** 0.5
        w1 = scale * jax.random.normal(k1, (dim_emb, dim_emb), jnp.float32)
        w2 = scale * jax.random.normal(k2, (dim_emb, dim_emb), jnp.float32)
        b1 = jnp.zeros((1, dim_emb), jnp.float32)
        b2 = jnp.zeros((1, dim_emb), jnp.float32)
        params.append((w1, b1, w2, b2))
    return params


def make_normalized_adjacency(key, n_nodes, p_edge=0.15):
    raw = jax.random.uniform(key, (n_nodes, n_nodes)) < p_edge
    adj = jnp.triu(raw.astype(jnp.float32), k=1)
    adj = adj + adj.T
    deg = jnp.maximum(adj.sum(axis=1), 1.0)
    d_inv_sqrt = 1.0 / jnp.sqrt(deg)
    return adj * d_inv_sqrt[:, None] * d_inv_sqrt[None, :]


if __name__ == "__main__":
    key = jax.random.PRNGKey(0)
    k_adj, k_feat, k_par = jax.random.split(key, 3)

    n_nodes = 64     # users + items
    dim_emb = 32     # embedding dimension
    n_layers = 3     # NGCF_GCN n_layers

    a_hat = make_normalized_adjacency(k_adj, n_nodes)
    features = jax.random.normal(k_feat, (n_nodes, dim_emb), jnp.float32)
    params = make_params(k_par, dim_emb, n_layers)

    # Fused single-kernel path (chosen automatically at this size).
    out = jax.block_until_ready(ngcf_gcn_forward(a_hat, features, params))
    ref = _reference_forward(a_hat, features, params)
    assert out.shape == (n_nodes, dim_emb)
    assert jnp.allclose(out, ref, atol=2e-2, rtol=2e-2)

    # Tiled path: (2 x 2) grid of row/neighbour tiles, int8 A_hat with in-kernel dequant.
    n2 = 256
    a2 = make_normalized_adjacency(k_adj, n2)
    f2 = jax.random.normal(k_feat, (n2, dim_emb), jnp.float32)
    out2 = jax.block_until_ready(
        ngcf_gcn_forward(a2, f2, params, use_fused=False, tm=128, tk=128))
    ref2 = _reference_forward(a2, f2, params, int8_a=True)
    assert out2.shape == (n2, dim_emb)
    assert jnp.allclose(out2, ref2, atol=2e-2, rtol=2e-2)

    print("KERNEL_OK")
</pallas_src>

<mosaic_0001>
module attributes {stable_mosaic.version = 11 : i64} {
  func.func @_ngcf_fused_kernel(%arg0: i32, %arg1: memref<64x64xbf16, #tpu.memory_space<vmem>>, %arg2: memref<64x128xf32, #tpu.memory_space<vmem>>, %arg3: memref<1x256x128xbf16, #tpu.memory_space<vmem>>, %arg4: memref<1x1x128xf32, #tpu.memory_space<vmem>>, %arg5: memref<64x128xf32, #tpu.memory_space<vmem>>, %arg6: memref<64x256xbf16, #tpu.memory_space<vmem>>) attributes {dimension_semantics = [#tpu.dimension_semantics<arbitrary>], iteration_bounds = array<i64: 3>, scalar_prefetch = 0 : i64, scratch_operands = 1 : i64, tpu.core_type = #tpu.core_type<tc>, window_params = [{pipeline_mode = #tpu.pipeline_mode<synchronous>, transform_indices = @transform_0, window_bounds = array<i64: 64, 64>}, {pipeline_mode = #tpu.pipeline_mode<synchronous>, transform_indices = @transform_1, window_bounds = array<i64: 64, 128>}, {transform_indices = @transform_2, window_bounds = array<i64: 1, 256, 128>}, {transform_indices = @transform_3, window_bounds = array<i64: 1, 1, 128>}, {pipeline_mode = #tpu.pipeline_mode<synchronous>, transform_indices = @transform_4, window_bounds = array<i64: 64, 128>}]} {
    %c0_i32 = arith.constant 0 : i32
    %0 = arith.cmpi eq, %arg0, %c0_i32 : i32
    %1 = arith.extui %0 : i1 to i32
    %c0_i32_0 = arith.constant 0 : i32
    %2 = arith.cmpi ne, %1, %c0_i32_0 : i32
    scf.if %2 {
      %c0_19 = arith.constant 0 : index
      %c0_20 = arith.constant 0 : index
      %27 = vector.load %arg2[%c0_19, %c0_20] : memref<64x128xf32, #tpu.memory_space<vmem>>, vector<64x128xf32>
      %c0_21 = arith.constant 0 : index
      %c0_22 = arith.constant 0 : index
      %28 = vector.load %arg5[%c0_21, %c0_22] : memref<64x128xf32, #tpu.memory_space<vmem>>, vector<64x128xf32>
      tpu.vector_store %arg5[%c0_21, %c0_22], %27 {strides = array<i32>} : memref<64x128xf32, #tpu.memory_space<vmem>>, vector<64x128xf32>,
    } else {
    }
    %c0 = arith.constant 0 : index
    %c0_1 = arith.constant 0 : index
    %3 = vector.load %arg5[%c0, %c0_1] : memref<64x128xf32, #tpu.memory_space<vmem>>, vector<64x128xf32>
    %c0_2 = arith.constant 0 : index
    %c0_3 = arith.constant 0 : index
    %4 = vector.load %arg1[%c0_2, %c0_3] : memref<64x64xbf16, #tpu.memory_space<vmem>>, vector<64x64xbf16>
    %5 = arith.truncf %3 : vector<64x128xf32> to vector<64x128xbf16>
    %cst = arith.constant dense<0.000000e+00> : vector<64x128xf32>
    %6 = tpu.matmul %4, %5, %cst {dimension_numbers = #tpu.dot_dimension_numbers<[1], [0], [0], [1], [0, 0, 1, 1], [], []>} : vector<64x64xbf16>, vector<64x128xbf16>, vector<64x128xf32> -> vector<64x128xf32>
    %7 = arith.addf %3, %6 : vector<64x128xf32>
    %8 = arith.truncf %7 : vector<64x128xf32> to vector<64x128xbf16>
    %c0_4 = arith.constant 0 : index
    %c0_5 = arith.constant 0 : index
    %9 = vector.load %arg6[%c0_4, %c0_5] : memref<64x256xbf16, #tpu.memory_space<vmem>>, vector<64x128xbf16>
    tpu.vector_store %arg6[%c0_4, %c0_5], %8 {strides = array<i32>} : memref<64x256xbf16, #tpu.memory_space<vmem>>, vector<64x128xbf16>,
    %10 = arith.mulf %6, %3 : vector<64x128xf32>
    %11 = arith.truncf %10 : vector<64x128xf32> to vector<64x128xbf16>
    %c0_6 = arith.constant 0 : index
    %c128 = arith.constant 128 : index
    %12 = vector.load %arg6[%c0_6, %c128] : memref<64x256xbf16, #tpu.memory_space<vmem>>, vector<64x128xbf16>
    tpu.vector_store %arg6[%c0_6, %c128], %11 {strides = array<i32>} : memref<64x256xbf16, #tpu.memory_space<vmem>>, vector<64x128xbf16>,
    %c0_7 = arith.constant 0 : index
    %c0_8 = arith.constant 0 : index
    %13 = vector.load %arg6[%c0_7, %c0_8] : memref<64x256xbf16, #tpu.memory_space<vmem>>, vector<64x256xbf16>
    %c0_9 = arith.constant 0 : index
    %c0_10 = arith.constant 0 : index
    %c0_11 = arith.constant 0 : index
    %14 = vector.load %arg3[%c0_9, %c0_10, %c0_11] : memref<1x256x128xbf16, #tpu.memory_space<vmem>>, vector<1x256x128xbf16>
    %15 = vector.shape_cast %14 : vector<1x256x128xbf16> to vector<256x128xbf16>
    %cst_12 = arith.constant dense<0.000000e+00> : vector<64x128xf32>
    %16 = tpu.matmul %13, %15, %cst_12 {dimension_numbers = #tpu.dot_dimension_numbers<[1], [0], [0], [1], [0, 0, 1, 1], [], []>} : vector<64x256xbf16>, vector<256x128xbf16>, vector<64x128xf32> -> vector<64x128xf32>
    %c0_13 = arith.constant 0 : index
    %c0_14 = arith.constant 0 : index
    %c0_15 = arith.constant 0 : index
    %17 = vector.load %arg4[%c0_13, %c0_14, %c0_15] : memref<1x1x128xf32, #tpu.memory_space<vmem>>, vector<1x1x128xf32>
    %18 = vector.shape_cast %17 : vector<1x1x128xf32> to vector<1x128xf32>
    %19 = vector.broadcast %18 : vector<1x128xf32> to vector<64x128xf32>
    %20 = arith.addf %16, %19 : vector<64x128xf32>
    %c2_i32 = arith.constant 2 : i32
    %21 = arith.cmpi ne, %arg0, %c2_i32 : i32
    %22 = arith.extui %21 : i1 to i32
    %c0_i32_16 = arith.constant 0 : i32
    %23 = arith.cmpi ne, %22, %c0_i32_16 : i32
    scf.if %23 {
      %cst_19 = arith.constant 0.000000e+00 : f32
      %27 = vector.broadcast %cst_19 : f32 to vector<64x128xf32>
      %28 = arith.cmpf ogt, %20, %27 : vector<64x128xf32>
      %cst_20 = arith.constant 2.000000e-01 : f32
      %29 = vector.broadcast %cst_20 : f32 to vector<64x128xf32>
      %30 = arith.mulf %29, %20 : vector<64x128xf32>
      %31 = arith.select %28, %20, %30 : vector<64x128xi1>, vector<64x128xf32>
      %c0_21 = arith.constant 0 : index
      %c0_22 = arith.constant 0 : index
      %32 = vector.load %arg5[%c0_21, %c0_22] : memref<64x128xf32, #tpu.memory_space<vmem>>, vector<64x128xf32>
      tpu.vector_store %arg5[%c0_21, %c0_22], %31 {strides = array<i32>} : memref<64x128xf32, #tpu.memory_space<vmem>>, vector<64x128xf32>,
    } else {
    }
    %c2_i32_17 = arith.constant 2 : i32
    %24 = arith.cmpi eq, %arg0, %c2_i32_17 : i32
    %25 = arith.extui %24 : i1 to i32
    %c0_i32_18 = arith.constant 0 : i32
    %26 = arith.cmpi ne, %25, %c0_i32_18 : i32
    scf.if %26 {
      %c0_19 = arith.constant 0 : index
      %c0_20 = arith.constant 0 : index
      %27 = vector.load %arg5[%c0_19, %c0_20] : memref<64x128xf32, #tpu.memory_space<vmem>>, vector<64x128xf32>
      tpu.vector_store %arg5[%c0_19, %c0_20], %20 {strides = array<i32>} : memref<64x128xf32, #tpu.memory_space<vmem>>, vector<64x128xf32>,
    } else {
    }
    return
  }
  func.func @transform_0(%arg0: i32) -> (i32, i32) {
    %c0_i32 = arith.constant 0 : i32
    %c0_i32_0 = arith.constant 0 : i32
    %c0_i32_1 = arith.constant 0 : i32
    return %c0_i32, %c0_i32_0 : i32, i32
  }
  func.func @transform_1(%arg0: i32) -> (i32, i32) {
    %c0_i32 = arith.constant 0 : i32
    %c0_i32_0 = arith.constant 0 : i32
    %c0_i32_1 = arith.constant 0 : i32
    return %c0_i32, %c0_i32_0 : i32, i32
  }
  func.func @transform_2(%arg0: i32) -> (i32, i32, i32) {
    %c0_i32 = arith.constant 0 : i32
    %c0_i32_0 = arith.constant 0 : i32
    %c0_i32_1 = arith.constant 0 : i32
    return %arg0, %c0_i32, %c0_i32_0 : i32, i32, i32
  }
  func.func @transform_3(%arg0: i32) -> (i32, i32, i32) {
    %c0_i32 = arith.constant 0 : i32
    %c0_i32_0 = arith.constant 0 : i32
    %c0_i32_1 = arith.constant 0 : i32
    return %arg0, %c0_i32, %c0_i32_0 : i32, i32, i32
  }
  func.func @transform_4(%arg0: i32) -> (i32, i32) {
    %c0_i32 = arith.constant 0 : i32
    %c0_i32_0 = arith.constant 0 : i32
    %c0_i32_1 = arith.constant 0 : i32
    return %c0_i32, %c0_i32_0 : i32, i32
  }
}

module attributes {stable_mosaic.version = 11 : i64} {
  func.func @_ngcf_fused_kernel(%arg0: i32, %arg1: memref<64x64xbf16, #tpu.memory_space<vmem>>, %arg2: memref<64x128xf32, #tpu.memory_space<vmem>>, %arg3: memref<1x256x128xbf16, #tpu.memory_space<vmem>>, %arg4: memref<1x1x128xf32, #tpu.memory_space<vmem>>, %arg5: memref<64x128xf32, #tpu.memory_space<vmem>>, %arg6: memref<64x256xbf16, #tpu.memory_space<vmem>>) attributes {dimension_semantics = [#tpu.dimension_semantics<arbitrary>], iteration_bounds = array<i64: 3>, scalar_prefetch = 0 : i64, scratch_operands = 1 : i64, tpu.core_type = #tpu.core_type<tc>, window_params = [{pipeline_mode = #tpu.pipeline_mode<synchronous>, transform_indices = @transform_0, window_bounds = array<i64: 64, 64>}, {pipeline_mode = #tpu.pipeline_mode<synchronous>, transform_indices = @transform_1, window_bounds = array<i64: 64, 128>}, {transform_indices = @transform_2, window_bounds = array<i64: 1, 256, 128>}, {transform_indices = @transform_3, window_bounds = array<i64: 1, 1, 128>}, {pipeline_mode = #tpu.pipeline_mode<synchronous>, transform_indices = @transform_4, window_bounds = array<i64: 64, 128>}]} {
    %c0_i32 = arith.constant 0 : i32
    %0 = arith.cmpi eq, %arg0, %c0_i32 : i32
    %1 = arith.extui %0 : i1 to i32
    %c0_i32_0 = arith.constant 0 : i32
    %2 = arith.cmpi ne, %1, %c0_i32_0 : i32
    scf.if %2 {
      %c0_19 = arith.constant 0 : index
      %c0_20 = arith.constant 0 : index
      %27 = vector.load %arg2[%c0_19, %c0_20] : memref<64x128xf32, #tpu.memory_space<vmem>>, vector<64x128xf32>
      %c0_21 = arith.constant 0 : index
      %c0_22 = arith.constant 0 : index
      %28 = vector.load %arg5[%c0_21, %c0_22] : memref<64x128xf32, #tpu.memory_space<vmem>>, vector<64x128xf32>
      tpu.vector_store %arg5[%c0_21, %c0_22], %27 {strides = array<i32>} : memref<64x128xf32, #tpu.memory_space<vmem>>, vector<64x128xf32>,
    } else {
    }
    %c0 = arith.constant 0 : index
    %c0_1 = arith.constant 0 : index
    %3 = vector.load %arg5[%c0, %c0_1] : memref<64x128xf32, #tpu.memory_space<vmem>>, vector<64x128xf32>
    %c0_2 = arith.constant 0 : index
    %c0_3 = arith.constant 0 : index
    %4 = vector.load %arg1[%c0_2, %c0_3] : memref<64x64xbf16, #tpu.memory_space<vmem>>, vector<64x64xbf16>
    %5 = arith.truncf %3 : vector<64x128xf32> to vector<64x128xbf16>
    %cst = arith.constant dense<0.000000e+00> : vector<64x128xf32>
    %6 = tpu.matmul %4, %5, %cst {dimension_numbers = #tpu.dot_dimension_numbers<[1], [0], [0], [1], [0, 0, 1, 1], [], []>} : vector<64x64xbf16>, vector<64x128xbf16>, vector<64x128xf32> -> vector<64x128xf32>
    %7 = arith.addf %3, %6 : vector<64x128xf32>
    %8 = arith.truncf %7 : vector<64x128xf32> to vector<64x128xbf16>
    %c0_4 = arith.constant 0 : index
    %c0_5 = arith.constant 0 : index
    %9 = vector.load %arg6[%c0_4, %c0_5] : memref<64x256xbf16, #tpu.memory_space<vmem>>, vector<64x128xbf16>
    tpu.vector_store %arg6[%c0_4, %c0_5], %8 {strides = array<i32>} : memref<64x256xbf16, #tpu.memory_space<vmem>>, vector<64x128xbf16>,
    %10 = arith.mulf %6, %3 : vector<64x128xf32>
    %11 = arith.truncf %10 : vector<64x128xf32> to vector<64x128xbf16>
    %c0_6 = arith.constant 0 : index
    %c128 = arith.constant 128 : index
    %12 = vector.load %arg6[%c0_6, %c128] : memref<64x256xbf16, #tpu.memory_space<vmem>>, vector<64x128xbf16>
    tpu.vector_store %arg6[%c0_6, %c128], %11 {strides = array<i32>} : memref<64x256xbf16, #tpu.memory_space<vmem>>, vector<64x128xbf16>,
    %c0_7 = arith.constant 0 : index
    %c0_8 = arith.constant 0 : index
    %13 = vector.load %arg6[%c0_7, %c0_8] : memref<64x256xbf16, #tpu.memory_space<vmem>>, vector<64x256xbf16>
    %c0_9 = arith.constant 0 : index
    %c0_10 = arith.constant 0 : index
    %c0_11 = arith.constant 0 : index
    %14 = vector.load %arg3[%c0_9, %c0_10, %c0_11] : memref<1x256x128xbf16, #tpu.memory_space<vmem>>, vector<1x256x128xbf16>
    %15 = vector.shape_cast %14 : vector<1x256x128xbf16> to vector<256x128xbf16>
    %cst_12 = arith.constant dense<0.000000e+00> : vector<64x128xf32>
    %16 = tpu.matmul %13, %15, %cst_12 {dimension_numbers = #tpu.dot_dimension_numbers<[1], [0], [0], [1], [0, 0, 1, 1], [], []>} : vector<64x256xbf16>, vector<256x128xbf16>, vector<64x128xf32> -> vector<64x128xf32>
    %c0_13 = arith.constant 0 : index
    %c0_14 = arith.constant 0 : index
    %c0_15 = arith.constant 0 : index
    %17 = vector.load %arg4[%c0_13, %c0_14, %c0_15] : memref<1x1x128xf32, #tpu.memory_space<vmem>>, vector<1x1x128xf32>
    %18 = vector.shape_cast %17 : vector<1x1x128xf32> to vector<1x128xf32>
    %19 = vector.broadcast %18 : vector<1x128xf32> to vector<64x128xf32>
    %20 = arith.addf %16, %19 : vector<64x128xf32>
    %c2_i32 = arith.constant 2 : i32
    %21 = arith.cmpi ne, %arg0, %c2_i32 : i32
    %22 = arith.extui %21 : i1 to i32
    %c0_i32_16 = arith.constant 0 : i32
    %23 = arith.cmpi ne, %22, %c0_i32_16 : i32
    scf.if %23 {
      %cst_19 = arith.constant 0.000000e+00 : f32
      %27 = vector.broadcast %cst_19 : f32 to vector<64x128xf32>
      %28 = arith.cmpf ogt, %20, %27 : vector<64x128xf32>
      %cst_20 = arith.constant 2.000000e-01 : f32
      %29 = vector.broadcast %cst_20 : f32 to vector<64x128xf32>
      %30 = arith.mulf %29, %20 : vector<64x128xf32>
      %31 = arith.select %28, %20, %30 : vector<64x128xi1>, vector<64x128xf32>
      %c0_21 = arith.constant 0 : index
      %c0_22 = arith.constant 0 : index
      %32 = vector.load %arg5[%c0_21, %c0_22] : memref<64x128xf32, #tpu.memory_space<vmem>>, vector<64x128xf32>
      tpu.vector_store %arg5[%c0_21, %c0_22], %31 {strides = array<i32>} : memref<64x128xf32, #tpu.memory_space<vmem>>, vector<64x128xf32>,
    } else {
    }
    %c2_i32_17 = arith.constant 2 : i32
    %24 = arith.cmpi eq, %arg0, %c2_i32_17 : i32
    %25 = arith.extui %24 : i1 to i32
    %c0_i32_18 = arith.constant 0 : i32
    %26 = arith.cmpi ne, %25, %c0_i32_18 : i32
    scf.if %26 {
      %c0_19 = arith.constant 0 : index
      %c0_20 = arith.constant 0 : index
      %27 = vector.load %arg5[%c0_19, %c0_20] : memref<64x128xf32, #tpu.memory_space<vmem>>, vector<64x128xf32>
      tpu.vector_store %arg5[%c0_19, %c0_20], %20 {strides = array<i32>} : memref<64x128xf32, #tpu.memory_space<vmem>>, vector<64x128xf32>,
    } else {
    }
    return
  }
  func.func @transform_0(%arg0: i32) -> (i32, i32) {
    %c0_i32 = arith.constant 0 : i32
    %c0_i32_0 = arith.constant 0 : i32
    %c0_i32_1 = arith.constant 0 : i32
    return %c0_i32, %c0_i32_0 : i32, i32
  }
  func.func @transform_1(%arg0: i32) -> (i32, i32) {
    %c0_i32 = arith.constant 0 : i32
    %c0_i32_0 = arith.constant 0 : i32
    %c0_i32_1 = arith.constant 0 : i32
    return %c0_i32, %c0_i32_0 : i32, i32
  }
  func.func @transform_2(%arg0: i32) -> (i32, i32, i32) {
    %c0_i32 = arith.constant 0 : i32
    %c0_i32_0 = arith.constant 0 : i32
    %c0_i32_1 = arith.constant 0 : i32
    return %arg0, %c0_i32, %c0_i32_0 : i32, i32, i32
  }
  func.func @transform_3(%arg0: i32) -> (i32, i32, i32) {
    %c0_i32 = arith.constant 0 : i32
    %c0_i32_0 = arith.constant 0 : i32
    %c0_i32_1 = arith.constant 0 : i32
    return %arg0, %c0_i32, %c0_i32_0 : i32, i32, i32
  }
  func.func @transform_4(%arg0: i32) -> (i32, i32) {
    %c0_i32 = arith.constant 0 : i32
    %c0_i32_0 = arith.constant 0 : i32
    %c0_i32_1 = arith.constant 0 : i32
    return %c0_i32, %c0_i32_0 : i32, i32
  }
}

</mosaic_0001>

<llo_original>
// kernel: tpu_custom_call.1
$region0: #{tpu_custom_call.1}
  #allocation0 [shape = 'u32[]', space=smem, size = 0x4, offset = 0x4, fixed_abs, tag = 'smem constant byte address 0x4 - core index']
  #allocation1 [shape = 'u32[144,128]{1,0:T(1,128)}', space=vmem, size = 0x12000, scoped, tag = 'internal scratch']
  #allocation2 [shape = 'bf16[64,256]{1,0:T(8,128)(2,1)}', space=vmem, size = 0x8000, scoped, tag = 'scratch operand']
  %s0 = inlined_call_operand.hbm [shape: bf16[64,64], index: 0, kind: input, shape index: {}]
  %s1 = inlined_call_operand.hbm [shape: f32[64,128], index: 1, kind: input, shape index: {}]
  %s2 = inlined_call_operand.hbm [shape: bf16[3,256,128], index: 2, kind: input, shape index: {}]
  %s3 = inlined_call_operand.vmem [shape: f32[3,1,128], index: 3, kind: input, shape index: {}]
  %s4 = inlined_call_operand.hbm [shape: f32[64,128], index: 4, kind: output, shape index: {}]
  %s5 = sld [smem:[#allocation0]]
  $region73: #{tpu_custom_call.1} parent=0
    _
  %s7 = ssub.s32 1, %s5
  %s8 = scalar_select 0, %s7, %s5
  $region1: #{tpu_custom_call.1} parent=0
    #allocation3 [shape = 'u8[16384]{0}', space=vmem, size = 0x4000, scoped, tag = 'input window, operand 0, single buffered']
    #allocation4 [shape = 's32[2]{0}', space=sflag, size = 0x8, scoped, tag = 'scoped memory for tpu_custom_call.1']
    #allocation5 [shape = 's32[2]{0}', space=sflag, size = 0x8, scoped, tag = 'scoped memory for tpu_custom_call.1']
    #allocation6 [shape = 'u8[32768]{0}', space=vmem, size = 0x8000, scoped, tag = 'input window, operand 1, single buffered']
    #allocation7 [shape = 's32[1]{0}', space=sflag, size = 0x4, scoped, tag = 'scoped memory for tpu_custom_call.1']
    #allocation8 [shape = 'u8[131072]{0}', space=vmem, size = 0x20000, scoped, tag = 'input window, operand 2']
    #allocation9 [shape = 'u8[32768]{0}', space=vmem, size = 0x8000, scoped, tag = 'output window, operand 0, single buffered']
    %9 = vsyncpa [#allocation4], 0
    %10 = vsyncpa [#allocation7], 0
    %11 = vsyncpa [#allocation5], 0
    loop: start=0, step=1, limit=5
    $region2: #{tpu_custom_call.1} parent=1 // loop_pre_header
      _
    $region3: #{tpu_custom_call.1} parent=1 // loop_header
      %s13 = sphi 0, %s17
      %p14 = scmp.ge.s32.totalorder %s13, 5
      %s21 = sphi 0, %s21
      %s23 = sphi 0, %s21
      %s24 = sphi 0, %s23
      %s38 = sphi 0, %s24
      %s42 = sphi 0, %s42
      %s44 = sphi 0, %s42
      %s45 = sphi 0, %s44
      %s59 = sphi 0, %s45
      %s65 = sphi 0, %s67
      %s68 = sphi 0, %s65
      %s69 = sphi 0, %s68
      %s85 = sphi 0, %s69
      %s91 = sphi 0, %s93
      %s94 = sphi 0, %s91
      %s95 = sphi 0, %s94
      %s111 = sphi 0, %s95
      %s115 = sphi 0, %s115
      %s117 = sphi 0, %s115
      %s118 = sphi 0, %s117
      %s132 = sphi 0, %s118
    $region4: #{tpu_custom_call.1} parent=1 // loop_header_branch
      %16 = sbr.rel (%p14) target = $region8
    $region5: #{tpu_custom_call.1} parent=1 // loop_body
      %s18 = ssub.s32 %s13, 1
      %s19 = ssub.s32 %s13, 2
      %s20 = sadd.s32 %s13, 1
      %s22 = sadd.s32 %s21, 1
      %p25 = scmp.eq.s32.totalorder %s13, 2
      %p26 = scmp.ne.s32.totalorder %s21, %s23
      %p27 = scmp.eq.s32.totalorder %s13, 0
      %p28 = por %p26, %p27
      %p29 = scmp.ne.s32.totalorder %s21, %s23
      %p30 = scmp.eq.s32.totalorder %s18, 2
      %p31 = por %p29, %p30
      %p32 = scmp.ne.s32.totalorder %s23, %s24
      %p33 = scmp.eq.s32.totalorder %s18, 0
      %p34 = por %p32, %p33
      %p35 = scmp.ne.s32.totalorder %s23, %s24
      %p36 = scmp.eq.s32.totalorder %s19, 2
      %p37 = por %p35, %p36
      %p39 = scmp.ne.s32.totalorder %s24, %s38
      %p40 = scmp.eq.s32.totalorder %s19, 0
      %p41 = por %p39, %p40
      %s43 = sadd.s32 %s42, 1
      %p46 = scmp.eq.s32.totalorder %s13, 2
      %p47 = scmp.ne.s32.totalorder %s42, %s44
      %p48 = scmp.eq.s32.totalorder %s13, 0
      %p49 = por %p47, %p48
      %p50 = scmp.ne.s32.totalorder %s42, %s44
      %p51 = scmp.eq.s32.totalorder %s18, 2
      %p52 = por %p50, %p51
      %p53 = scmp.ne.s32.totalorder %s44, %s45
      %p54 = scmp.eq.s32.totalorder %s18, 0
      %p55 = por %p53, %p54
      %p56 = scmp.ne.s32.totalorder %s44, %s45
      %p57 = scmp.eq.s32.totalorder %s19, 2
      %p58 = por %p56, %p57
      %p60 = scmp.ne.s32.totalorder %s45, %s59
      %p61 = scmp.eq.s32.totalorder %s19, 0
      %p62 = por %p60, %p61
      %s63 = ssub.s32 %s13, %s20
      %p64 = scmp.eq.s32.totalorder %s63, 0
      %s66 = sadd.s32 %s65, 1
      %s67 = scalar_select %p64, %s65, %s66
      %p70 = pneg %p64
      %p71 = scmp.eq.s32.totalorder %s13, 2
      %p72 = por %p70, %p71
      %p73 = scmp.ne.s32.totalorder %s65, %s68
      %p74 = scmp.eq.s32.totalorder %s13, 0
      %p75 = por %p73, %p74
      %p76 = scmp.ne.s32.totalorder %s65, %s68
      %p77 = scmp.eq.s32.totalorder %s18, 2
      %p78 = por %p76, %p77
      %p79 = scmp.ne.s32.totalorder %s68, %s69
      %p80 = scmp.eq.s32.totalorder %s18, 0
      %p81 = por %p79, %p80
      %p82 = scmp.ne.s32.totalorder %s68, %s69
      %p83 = scmp.eq.s32.totalorder %s19, 2
      %p84 = por %p82, %p83
      %p86 = scmp.ne.s32.totalorder %s69, %s85
      %p87 = scmp.eq.s32.totalorder %s19, 0
      %p88 = por %p86, %p87
      %s89 = ssub.s32 %s13, %s20
      %p90 = scmp.eq.s32.totalorder %s89, 0
      %s92 = sadd.s32 %s91, 1
      %s93 = scalar_select %p90, %s91, %s92
      %p96 = pneg %p90
      %p97 = scmp.eq.s32.totalorder %s13, 2
      %p98 = por %p96, %p97
      %p99 = scmp.ne.s32.totalorder %s91, %s94
      %p100 = scmp.eq.s32.totalorder %s13, 0
      %p101 = por %p99, %p100
      %p102 = scmp.ne.s32.totalorder %s91, %s94
      %p103 = scmp.eq.s32.totalorder %s18, 2
      %p104 = por %p102, %p103
      %p105 = scmp.ne.s32.totalorder %s94, %s95
      %p106 = scmp.eq.s32.totalorder %s18, 0
      %p107 = por %p105, %p106
      %p108 = scmp.ne.s32.totalorder %s94, %s95
      %p109 = scmp.eq.s32.totalorder %s19, 2
      %p110 = por %p108, %p109
      %p112 = scmp.ne.s32.totalorder %s95, %s111
      %p113 = scmp.eq.s32.totalorder %s19, 0
      %p114 = por %p112, %p113
      %s116 = sadd.s32 %s115, 1
      %p119 = scmp.eq.s32.totalorder %s13, 2
      %p120 = scmp.ne.s32.totalorder %s115, %s117
      %p121 = scmp.eq.s32.totalorder %s13, 0
      %p122 = por %p120, %p121
      %p123 = scmp.ne.s32.totalorder %s115, %s117
      %p124 = scmp.eq.s32.totalorder %s18, 2
      %p125 = por %p123, %p124
      %p126 = scmp.ne.s32.totalorder %s117, %s118
      %p127 = scmp.eq.s32.totalorder %s18, 0
      %p128 = por %p126, %p127
      %p129 = scmp.ne.s32.totalorder %s117, %s118
      %p130 = scmp.eq.s32.totalorder %s19, 2
      %p131 = por %p129, %p130
      %p133 = scmp.ne.s32.totalorder %s118, %s132
      %p134 = scmp.eq.s32.totalorder %s19, 0
      %p135 = por %p133, %p134
      %p136 = scmp.le.s32.totalorder 1, %s13
      %p137 = scmp.lt.s32.totalorder %s13, 4
      %p138 = pnand %p136, %p137
      %p139 = pneg %p138
      // Predicated region
      $region9: #{tpu_custom_call.1} parent=5 // pred_check
        _
      $region10: #{tpu_custom_call.1} parent=5 // pred_check_branch
        %141 = sbr.rel (%p138) target = $region12
      $region11: #{tpu_custom_call.1} parent=5 // pred_region
        %s142 = ssub.s32 %s13, 1
        // Predicated region
        $region13: #{tpu_custom_call.1} parent=11 // pred_check
          %p143 = pneg %p34
        $region14: #{tpu_custom_call.1} parent=11 // pred_check_branch
          %145 = sbr.rel (%p143) target = $region16
        $region15: #{tpu_custom_call.1} parent=11 // pred_region
          %s147 = ssub.s32 512, 512
          %148 = vsyncadd [#allocation4], %s147
          %s149 = sshll.u32 [#allocation3], 4
          %s150 = int_to_ptr.vmem [resolvable:$true] %s149
          %155 = dma.hbm_to_vmem [thread:$0]  %s0, 512, %s150, [#allocation4], 64, 64, 4
        $region16: #{tpu_custom_call.1} parent=11 // pred_fallthru
          _
        // Predicated region
        $region17: #{tpu_custom_call.1} parent=11 // pred_check
          %p156 = pneg %p55
        $region18: #{tpu_custom_call.1} parent=11 // pred_check_branch
          %158 = sbr.rel (%p156) target = $region20
        $region19: #{tpu_custom_call.1} parent=11 // pred_region
          %s160 = ssub.s32 1024, 1024
          %161 = vsyncadd [#allocation7], %s160
          %s162 = sshll.u32 [#allocation6], 4
          %s163 = int_to_ptr.vmem [resolvable:$true] %s162
          %168 = dma.hbm_to_vmem [thread:$0]  %s1, 1024, %s163, [#allocation7], 128, 128, 8
        $region20: #{tpu_custom_call.1} parent=11 // pred_fallthru
          _
      $region12: #{tpu_custom_call.1} parent=5 // pred_fallthru
        _
      %p169 = scmp.lt.s32.totalorder %s13, 3
      // Predicated region
      $region21: #{tpu_custom_call.1} parent=5 // pred_check
        %p170 = pneg %p169
      $region22: #{tpu_custom_call.1} parent=5 // pred_check_branch
        %172 = sbr.rel (%p170) target = $region24
      $region23: #{tpu_custom_call.1} parent=5 // pred_region
        // Predicated region
        $region25: #{tpu_custom_call.1} parent=23 // pred_check
          %p173 = pneg %p75
        $region26: #{tpu_custom_call.1} parent=23 // pred_check_branch
          %175 = sbr.rel (%p173) target = $region28
        $region27: #{tpu_custom_call.1} parent=23 // pred_region
          %s176 = sand.u32 %s13, 1
          %s177 = scalar_lea.sflag [#allocation4], %s176
          %s178 = sand.u32 %s65, 1
          %s179 = smul.addr %s178, 128
          %s180 = scalar_lea.vmem [#allocation8], %s179
          %s182 = ssub.s32 2048, 2048
          %183 = vsyncadd %s177, %s182
          %s184 = smul.addr %s13, 32
          %s185 = smul.addr %s184, 64
          %s186 = scalar_lea.hbm %s2, %s185
          %s187 = sshll.u32 %s180, 4
          %s188 = int_to_ptr.vmem [resolvable:$true] %s187
          %193 = dma.hbm_to_vmem [thread:$0]  %s186, 2048, %s188, %s177, 64, 64, 4
        $region28: #{tpu_custom_call.1} parent=23 // pred_fallthru
          _
        // Predicated region
        $region29: #{tpu_custom_call.1} parent=23 // pred_check
          %p194 = pneg %p101
        $region30: #{tpu_custom_call.1} parent=23 // pred_check_branch
          %196 = sbr.rel (%p194) target = $region32
        $region31: #{tpu_custom_call.1} parent=23 // pred_region
          %p197 = scmp.lt.s32.totalorder %s13, 2
          %s198 = scalar_select %p197, %s13, 2
          %s199 = scalar_lea.vmem %s3, %s198
        $region32: #{tpu_custom_call.1} parent=23 // pred_fallthru
          _
      $region24: #{tpu_custom_call.1} parent=5 // pred_fallthru
        _
      %p200 = scmp.le.s32.totalorder 1, %s13
      %p201 = scmp.lt.s32.totalorder %s13, 4
      %p202 = pnand %p200, %p201
      %p203 = pneg %p202
      // Predicated region
      $region33: #{tpu_custom_call.1} parent=5 // pred_check
        _
      $region34: #{tpu_custom_call.1} parent=5 // pred_check_branch
        %205 = sbr.rel (%p202) target = $region36
      $region35: #{tpu_custom_call.1} parent=5 // pred_region
        %s206 = ssub.s32 %s13, 1
        // Predicated region
        $region37: #{tpu_custom_call.1} parent=35 // pred_check
          %p207 = pneg %p34
        $region38: #{tpu_custom_call.1} parent=35 // pred_check_branch
          %209 = sbr.rel (%p207) target = $region40
        $region39: #{tpu_custom_call.1} parent=35 // pred_region
          %210 = dma.done [#allocation4], 512
        $region40: #{tpu_custom_call.1} parent=35 // pred_fallthru
          _
        // Predicated region
        $region41: #{tpu_custom_call.1} parent=35 // pred_check
          %p211 = pneg %p55
        $region42: #{tpu_custom_call.1} parent=35 // pred_check_branch
          %213 = sbr.rel (%p211) target = $region44
        $region43: #{tpu_custom_call.1} parent=35 // pred_region
          %214 = dma.done [#allocation7], 1024
        $region44: #{tpu_custom_call.1} parent=35 // pred_fallthru
          _
        %s215 = sand.u32 %s18, 1
        %s216 = scalar_lea.sflag [#allocation4], %s215
        %s217 = sand.u32 %s68, 1
        %s218 = smul.addr %s217, 128
        %s219 = scalar_lea.vmem [#allocation8], %s218
        // Predicated region
        $region45: #{tpu_custom_call.1} parent=35 // pred_check
          %p220 = pneg %p81
        $region46: #{tpu_custom_call.1} parent=35 // pred_check_branch
          %222 = sbr.rel (%p220) target = $region48
        $region47: #{tpu_custom_call.1} parent=35 // pred_region
          %223 = dma.done %s216, 2048
        $region48: #{tpu_custom_call.1} parent=35 // pred_fallthru
          _
        %p224 = pneg %p34
        %p225 = pneg %p31
        %p226 = pneg %p55
        %p227 = pneg %p52
        %s228 = sand.u32 %s18, 1
        %s229 = scalar_lea.sflag [#allocation4], %s228
        %s230 = sand.u32 %s68, 1
        %s231 = smul.addr %s230, 128
        %s232 = scalar_lea.vmem [#allocation8], %s231
        %p233 = pneg %p81
        %p234 = pneg %p78
        %p235 = scmp.lt.s32.totalorder %s18, 2
        %s236 = scalar_select %p235, %s18, 2
        %s237 = scalar_lea.vmem %s3, %s236
        %p238 = pneg %p107
        %p239 = pneg %p104
        %p240 = pneg %p128
        %p241 = pneg %p125
        %p242 = scmp.lt.s32.totalorder %s18, 2
        %s243 = scalar_select %p242, %s18, 2
        %s244 = scalar_lea.vmem %s3, %s243
        %p246 = scmp.eq.s32.totalorder %s18, 0
        // Predicated region
        $region49: #{tpu_custom_call.1} parent=35 // pred_check
          %p247 = pneg %p246
        $region50: #{tpu_custom_call.1} parent=35 // pred_check_branch
          %249 = sbr.rel (%p247) target = $region52
        $region51: #{tpu_custom_call.1} parent=35 // pred_region
          %v250 = vld [vmem:[#allocation6] sm:$0xff]
          %v251 = vld [vmem:[#allocation6 + $0x8] sm:$0xff]
          %v252 = vld [vmem:[#allocation6 + $0x10] sm:$0xff]
          %v253 = vld [vmem:[#allocation6 + $0x18] sm:$0xff]
          %v254 = vld [vmem:[#allocation6 + $0x20] sm:$0xff]
          %v255 = vld [vmem:[#allocation6 + $0x28] sm:$0xff]
          %v256 = vld [vmem:[#allocation6 + $0x30] sm:$0xff]
          %v257 = vld [vmem:[#allocation6 + $0x38] sm:$0xff]
          %258 = vst [vmem:[#allocation9] sm:$0xff] %v250
          %259 = vst [vmem:[#allocation9 + $0x8] sm:$0xff] %v251
          %260 = vst [vmem:[#allocation9 + $0x10] sm:$0xff] %v252
          %261 = vst [vmem:[#allocation9 + $0x18] sm:$0xff] %v253
          %262 = vst [vmem:[#allocation9 + $0x20] sm:$0xff] %v254
          %263 = vst [vmem:[#allocation9 + $0x28] sm:$0xff] %v255
          %264 = vst [vmem:[#allocation9 + $0x30] sm:$0xff] %v256
          %265 = vst [vmem:[#allocation9 + $0x38] sm:$0xff] %v257
        $region52: #{tpu_custom_call.1} parent=35 // pred_fallthru
          _
        %v266 = vld [vmem:[#allocation9] sm:$0xff]
        %v267 = vld [vmem:[#allocation9 + $0x8] sm:$0xff]
        %v268 = vld [vmem:[#allocation9 + $0x10] sm:$0xff]
        %v269 = vld [vmem:[#allocation9 + $0x18] sm:$0xff]
        %v270 = vld [vmem:[#allocation9 + $0x20] sm:$0xff]
        %v271 = vld [vmem:[#allocation9 + $0x28] sm:$0xff]
        %v272 = vld [vmem:[#allocation9 + $0x30] sm:$0xff]
        %v273 = vld [vmem:[#allocation9 + $0x38] sm:$0xff]
        %v274 = vld [vmem:[#allocation3] sm:$0xf]
        %v275 = vld [vmem:[#allocation3 + $0x4] sm:$0xf]
        %v276 = vld [vmem:[#allocation3 + $0x8] sm:$0xf]
        %v277 = vld [vmem:[#allocation3 + $0xc] sm:$0xf]
        %v278 = vld [vmem:[#allocation3 + $0x10] sm:$0xf]
        %v279 = vld [vmem:[#allocation3 + $0x14] sm:$0xf]
        %v280 = vld [vmem:[#allocation3 + $0x18] sm:$0xf]
        %v281 = vld [vmem:[#allocation3 + $0x1c] sm:$0xf]
        %v282 = vpack.c.bf16 %v267, %v266
        %v283 = vpack.c.bf16 %v269, %v268
        %v284 = vpack.c.bf16 %v271, %v270
        %v285 = vpack.c.bf16 %v273, %v272
        %v294 = vunpack.c.l.b16 %v274
        %v295 = vunpack.c.l.b16 %v275
        %v296 = vunpack.c.l.b16 %v276
        %v297 = vunpack.c.l.b16 %v277
        %v298 = vunpack.c.l.b16 %v278
        %v299 = vunpack.c.l.b16 %v279
        %v300 = vunpack.c.l.b16 %v280
        %v301 = vunpack.c.l.b16 %v281
        %v302 = vpack.c.b16 %v295, %v294
        %v303 = vpack.c.b16 %v297, %v296
        %v304 = vpack.c.b16 %v299, %v298
        %v305 = vpack.c.b16 %v301, %v300
        %vm306 = vcmask 523264
        %v308 = vsel %vm306, %v302, 0
        %v311 = vsel %vm306, %v303, 0
        %v314 = vsel %vm306, %v304, 0
        %v317 = vsel %vm306, %v305, 0
        %319 = vmatprep.subr.bf16.mxu0 0
        %320 = vmatpush1.bf16.msra.mxu0 0
        %321 = vmatprep.subr.bf16.mxu0 0
        %322 = vmatpush1.bf16.msra.mxu0 0
        %323 = vmatprep.subr.bf16.mxu0 0
        %324 = vmatpush1.bf16.msra.mxu0 0
        %325 = vmatprep.subr.bf16.mxu0 0
        %326 = vmatpush1.bf16.msra.mxu0 0
        %327 = vmatprep.subr.bf16.mxu0 0
        %328 = vmatpush1.bf16.msra.mxu0 %v285
        %329 = vmatprep.subr.bf16.mxu0 0
        %330 = vmatpush1.bf16.msra.mxu0 %v284
        %331 = vmatprep.subr.bf16.mxu0 0
        %332 = vmatpush1.bf16.msra.mxu0 %v283
        %333 = vmatprep.subr.bf16.mxu0 0
        %334 = vmatpush1.bf16.msra.mxu0 %v282
        %335 = vmatprep.subr.bf16.mxu0 0
        %336 = vmatpush2.bf16.msra.mxu0 0
        %337 = vmatprep.subr.bf16.mxu0 0
        %338 = vmatpush2.bf16.msra.mxu0 0
        %339 = vmatprep.subr.bf16.mxu0 0
        %340 = vmatpush2.bf16.msra.mxu0 0
        %341 = vmatprep.subr.bf16.mxu0 0
        %342 = vmatpush2.bf16.msra.mxu0 0
        %343 = vmatprep.subr.bf16.mxu0 0
        %344 = vmatpush2.bf16.msra.mxu0 0
        %345 = vmatprep.subr.bf16.mxu0 0
        %346 = vmatpush2.bf16.msra.mxu0 0
        %347 = vmatprep.subr.bf16.mxu0 0
        %348 = vmatpush2.bf16.msra.mxu0 0
        %349 = vmatprep.subr.bf16.mxu0 0
        %350 = vmatpush2.bf16.msra.mxu0 0
        %351 = vmatprep.mubr.bf16.mxu0 0
        %352 = vmatmul.mubr.bf16.gmra.mxu0 %v308
        %v353 = vpop.f32.mrf.mxu0
        %v354 = vadd.f32 0.0, %v353
        %v355 = vpop.f32.mrf.mxu0
        %v356 = vpop.f32.mrf.mxu0
        %v357 = vadd.f32 0.0, %v356
        %v358 = vpop.f32.mrf.mxu0
        %359 = vmatprep.mubr.bf16.mxu0 0
        %360 = vmatmul.mubr.bf16.gmra.mxu0 %v311
        %v361 = vpop.f32.mrf.mxu0
        %v362 = vadd.f32 0.0, %v361
        %v363 = vpop.f32.mrf.mxu0
        %v364 = vpop.f32.mrf.mxu0
        %v365 = vadd.f32 0.0, %v364
        %v366 = vpop.f32.mrf.mxu0
        %367 = vmatprep.mubr.bf16.mxu0 0
        %368 = vmatmul.mubr.bf16.gmra.mxu0 %v314
        %v369 = vpop.f32.mrf.mxu0
        %v370 = vadd.f32 0.0, %v369
        %v371 = vpop.f32.mrf.mxu0
        %v372 = vpop.f32.mrf.mxu0
        %v373 = vadd.f32 0.0, %v372
        %v374 = vpop.f32.mrf.mxu0
        %375 = vmatprep.mubr.bf16.mxu0 0
        %376 = vmatmul.mubr.bf16.gmra.mxu0 %v317
        %v377 = vpop.f32.mrf.mxu0
        %v378 = vadd.f32 0.0, %v377
        %v379 = vpop.f32.mrf.mxu0
        %v380 = vpop.f32.mrf.mxu0
        %v381 = vadd.f32 0.0, %v380
        %v382 = vpop.f32.mrf.mxu0
        %383 = vdwg.mxu0
        %v384 = vadd.f32 %v266, %v354
        %v385 = vadd.f32 %v267, %v357
        %v386 = vadd.f32 %v268, %v362
        %v387 = vadd.f32 %v269, %v365
        %v388 = vadd.f32 %v270, %v370
        %v389 = vadd.f32 %v271, %v373
        %v390 = vadd.f32 %v272, %v378
        %v391 = vadd.f32 %v273, %v381
        %v392 = vpack.c.bf16 %v385, %v384
        %v393 = vpack.c.bf16 %v387, %v386
        %v394 = vpack.c.bf16 %v389, %v388
        %v395 = vpack.c.bf16 %v391, %v390
        %v400 = vunpack.c.l.b16 %v392
        %v401 = vunpack.c.h.b16 %v392
        %v402 = vunpack.c.l.b16 %v393
        %v403 = vunpack.c.h.b16 %v393
        %v404 = vunpack.c.l.b16 %v394
        %v405 = vunpack.c.h.b16 %v394
        %v406 = vunpack.c.l.b16 %v395
        %v407 = vunpack.c.h.b16 %v395
        %v408 = vpack.c.b16 %v400, %v400
        %v409 = vpack.c.b16 %v401, %v401
        %v410 = vpack.c.b16 %v402, %v402
        %v411 = vpack.c.b16 %v403, %v403
        %v412 = vpack.c.b16 %v404, %v404
        %v413 = vpack.c.b16 %v405, %v405
        %v414 = vpack.c.b16 %v406, %v406
        %v415 = vpack.c.b16 %v407, %v407
        %424 = vst [vmem:[#allocation2] sm:$0xf] %v408
        %425 = vst [vmem:[#allocation2 + $0x8] sm:$0xf] %v409
        %426 = vst [vmem:[#allocation2 + $0x10] sm:$0xf] %v410
        %427 = vst [vmem:[#allocation2 + $0x18] sm:$0xf] %v411
        %428 = vst [vmem:[#allocation2 + $0x20] sm:$0xf] %v412
        %429 = vst [vmem:[#allocation2 + $0x28] sm:$0xf] %v413
        %430 = vst [vmem:[#allocation2 + $0x30] sm:$0xf] %v414
        %431 = vst [vmem:[#allocation2 + $0x38] sm:$0xf] %v415
        %v432 = vmul.f32 %v354, %v266
        %v433 = vmul.f32 %v357, %v267
        %v434 = vmul.f32 %v362, %v268
        %v435 = vmul.f32 %v365, %v269
        %v436 = vmul.f32 %v370, %v270
        %v437 = vmul.f32 %v373, %v271
        %v438 = vmul.f32 %v378, %v272
        %v439 = vmul.f32 %v381, %v273
        %v440 = vpack.c.bf16 %v433, %v432
        %v441 = vpack.c.bf16 %v435, %v434
        %v442 = vpack.c.bf16 %v437, %v436
        %v443 = vpack.c.bf16 %v439, %v438
        %v448 = vunpack.c.l.b16 %v440
        %v449 = vunpack.c.h.b16 %v440
        %v450 = vunpack.c.l.b16 %v441
        %v451 = vunpack.c.h.b16 %v441
        %v452 = vunpack.c.l.b16 %v442
        %v453 = vunpack.c.h.b16 %v442
        %v454 = vunpack.c.l.b16 %v443
        %v455 = vunpack.c.h.b16 %v443
        %v456 = vpack.c.b16 %v448, %v448
        %v457 = vpack.c.b16 %v449, %v449
        %v458 = vpack.c.b16 %v450, %v450
        %v459 = vpack.c.b16 %v451, %v451
        %v460 = vpack.c.b16 %v452, %v452
        %v461 = vpack.c.b16 %v453, %v453
        %v462 = vpack.c.b16 %v454, %v454
        %v463 = vpack.c.b16 %v455, %v455
        %472 = vst [vmem:[#allocation2 + $0x4] sm:$0xf] %v456
        %473 = vst [vmem:[#allocation2 + $0xc] sm:$0xf] %v457
        %474 = vst [vmem:[#allocation2 + $0x14] sm:$0xf] %v458
        %475 = vst [vmem:[#allocation2 + $0x1c] sm:$0xf] %v459
        %476 = vst [vmem:[#allocation2 + $0x24] sm:$0xf] %v460
        %477 = vst [vmem:[#allocation2 + $0x2c] sm:$0xf] %v461
        %478 = vst [vmem:[#allocation2 + $0x34] sm:$0xf] %v462
        %479 = vst [vmem:[#allocation2 + $0x3c] sm:$0xf] %v463
        %v480 = vld [vmem:[#allocation2] sm:$0xff]
        %v481 = vld [vmem:[#allocation2 + $0x8] sm:$0xff]
        %v482 = vld [vmem:[#allocation2 + $0x10] sm:$0xff]
        %v483 = vld [vmem:[#allocation2 + $0x18] sm:$0xff]
        %v484 = vld [vmem:[#allocation2 + $0x20] sm:$0xff]
        %v485 = vld [vmem:[#allocation2 + $0x28] sm:$0xff]
        %v486 = vld [vmem:[#allocation2 + $0x30] sm:$0xff]
        %v487 = vld [vmem:[#allocation2 + $0x38] sm:$0xff]
        %v488 = vld [vmem:[%s219] sm:$0xf]
        %v489 = vld [vmem:[%s219 + $0x4] sm:$0xf]
        %v490 = vld [vmem:[%s219 + $0x8] sm:$0xf]
        %v491 = vld [vmem:[%s219 + $0xc] sm:$0xf]
        %v492 = vld [vmem:[%s219 + $0x10] sm:$0xf]
        %v493 = vld [vmem:[%s219 + $0x14] sm:$0xf]
        %v494 = vld [vmem:[%s219 + $0x18] sm:$0xf]
        %v495 = vld [vmem:[%s219 + $0x1c] sm:$0xf]
        %v496 = vld [vmem:[%s219 + $0x20] sm:$0xf]
        %v497 = vld [vmem:[%s219 + $0x24] sm:$0xf]
        %v498 = vld [vmem:[%s219 + $0x28] sm:$0xf]
        %v499 = vld [vmem:[%s219 + $0x2c] sm:$0xf]
        %v500 = vld [vmem:[%s219 + $0x30] sm:$0xf]
        %v501 = vld [vmem:[%s219 + $0x34] sm:$0xf]
        %v502 = vld [vmem:[%s219 + $0x38] sm:$0xf]
        %v503 = vld [vmem:[%s219 + $0x3c] sm:$0xf]
        %v504 = vld [vmem:[%s219 + $0x40] sm:$0xf]
        %v505 = vld [vmem:[%s219 + $0x44] sm:$0xf]
        %v506 = vld [vmem:[%s219 + $0x48] sm:$0xf]
        %v507 = vld [vmem:[%s219 + $0x4c] sm:$0xf]
        %v508 = vld [vmem:[%s219 + $0x50] sm:$0xf]
        %v509 = vld [vmem:[%s219 + $0x54] sm:$0xf]
        %v510 = vld [vmem:[%s219 + $0x58] sm:$0xf]
        %v511 = vld [vmem:[%s219 + $0x5c] sm:$0xf]
        %v512 = vld [vmem:[%s219 + $0x60] sm:$0xf]
        %v513 = vld [vmem:[%s219 + $0x64] sm:$0xf]
        %v514 = vld [vmem:[%s219 + $0x68] sm:$0xf]
        %v515 = vld [vmem:[%s219 + $0x6c] sm:$0xf]
        %v516 = vld [vmem:[%s219 + $0x70] sm:$0xf]
        %v517 = vld [vmem:[%s219 + $0x74] sm:$0xf]
        %v518 = vld [vmem:[%s219 + $0x78] sm:$0xf]
        %v519 = vld [vmem:[%s219 + $0x7c] sm:$0xf]
        %v520 = vld [vmem:[%s244] sm:$0x1]
        %v522 = vlaneseq
        %v523 = vshrl.u32 %v522, 7
        %v524 = vsub.s32 0, %v523
        %v525 = vrot.slane %v520, %v524
        %v535 = vunpack.c.l.b16 %v480
        %v536 = vunpack.c.h.b16 %v480
        %v537 = vunpack.c.l.b16 %v481
        %v538 = vunpack.c.h.b16 %v481
        %v539 = vunpack.c.l.b16 %v482
        %v540 = vunpack.c.h.b16 %v482
        %v541 = vunpack.c.l.b16 %v483
        %v542 = vunpack.c.h.b16 %v483
        %v543 = vunpack.c.l.b16 %v484
        %v544 = vunpack.c.h.b16 %v484
        %v545 = vunpack.c.l.b16 %v485
        %v546 = vunpack.c.h.b16 %v485
        %v547 = vunpack.c.l.b16 %v486
        %v548 = vunpack.c.h.b16 %v486
        %v549 = vunpack.c.l.b16 %v487
        %v550 = vunpack.c.h.b16 %v487
        %v551 = vpack.c.b16 %v537, %v535
        %v552 = vpack.c.b16 %v538, %v536
        %v553 = vpack.c.b16 %v541, %v539
        %v554 = vpack.c.b16 %v542, %v540
        %v555 = vpack.c.b16 %v545, %v543
        %v556 = vpack.c.b16 %v546, %v544
        %v557 = vpack.c.b16 %v549, %v547
        %v558 = vpack.c.b16 %v550, %v548
        %v599 = vunpack.c.l.b16 %v488
        %v600 = vunpack.c.l.b16 %v489
        %v601 = vunpack.c.l.b16 %v490
        %v602 = vunpack.c.l.b16 %v491
        %v603 = vunpack.c.l.b16 %v492
        %v604 = vunpack.c.l.b16 %v493
        %v605 = vunpack.c.l.b16 %v494
        %v606 = vunpack.c.l.b16 %v495
        %v607 = vunpack.c.l.b16 %v496
        %v608 = vunpack.c.l.b16 %v497
        %v609 = vunpack.c.l.b16 %v498
        %v610 = vunpack.c.l.b16 %v499
        %v611 = vunpack.c.l.b16 %v500
        %v612 = vunpack.c.l.b16 %v501
        %v613 = vunpack.c.l.b16 %v502
        %v614 = vunpack.c.l.b16 %v503
        %v615 = vunpack.c.l.b16 %v504
        %v616 = vunpack.c.l.b16 %v505
        %v617 = vunpack.c.l.b16 %v506
        %v618 = vunpack.c.l.b16 %v507
        %v619 = vunpack.c.l.b16 %v508
        %v620 = vunpack.c.l.b16 %v509
        %v621 = vunpack.c.l.b16 %v510
        %v622 = vunpack.c.l.b16 %v511
        %v623 = vunpack.c.l.b16 %v512
        %v624 = vunpack.c.l.b16 %v513
        %v625 = vunpack.c.l.b16 %v514
        %v626 = vunpack.c.l.b16 %v515
        %v627 = vunpack.c.l.b16 %v516
        %v628 = vunpack.c.l.b16 %v517
        %v629 = vunpack.c.l.b16 %v518
        %v630 = vunpack.c.l.b16 %v519
        %v631 = vpack.c.b16 %v600, %v599
        %v632 = vpack.c.b16 %v602, %v601
        %v633 = vpack.c.b16 %v604, %v603
        %v634 = vpack.c.b16 %v606, %v605
        %v635 = vpack.c.b16 %v608, %v607
        %v636 = vpack.c.b16 %v610, %v609
        %v637 = vpack.c.b16 %v612, %v611
        %v638 = vpack.c.b16 %v614, %v613
        %v639 = vpack.c.b16 %v616, %v615
        %v640 = vpack.c.b16 %v618, %v617
        %v641 = vpack.c.b16 %v620, %v619
        %v642 = vpack.c.b16 %v622, %v621
        %v643 = vpack.c.b16 %v624, %v623
        %v644 = vpack.c.b16 %v626, %v625
        %v645 = vpack.c.b16 %v628, %v627
        %v646 = vpack.c.b16 %v630, %v629
        %663 = vmatprep.subr.bf16.mxu0 0
        %664 = vmatpush1.bf16.msra.mxu0 %v638
        %665 = vmatprep.subr.bf16.mxu0 0
        %666 = vmatpush1.bf16.msra.mxu0 %v637
        %667 = vmatprep.subr.bf16.mxu0 0
        %668 = vmatpush1.bf16.msra.mxu0 %v636
        %669 = vmatprep.subr.bf16.mxu0 0
        %670 = vmatpush1.bf16.msra.mxu0 %v635
        %671 = vmatprep.subr.bf16.mxu0 0
        %672 = vmatpush1.bf16.msra.mxu0 %v634
        %673 = vmatprep.subr.bf16.mxu0 0
        %674 = vmatpush1.bf16.msra.mxu0 %v633
        %675 = vmatprep.subr.bf16.mxu0 0
        %676 = vmatpush1.bf16.msra.mxu0 %v632
        %677 = vmatprep.subr.bf16.mxu0 0
        %678 = vmatpush1.bf16.msra.mxu0 %v631
        %679 = vmatprep.subr.bf16.mxu0 0
        %680 = vmatpush2.bf16.msra.mxu0 %v646
        %681 = vmatprep.subr.bf16.mxu0 0
        %682 = vmatpush2.bf16.msra.mxu0 %v645
        %683 = vmatprep.subr.bf16.mxu0 0
        %684 = vmatpush2.bf16.msra.mxu0 %v644
        %685 = vmatprep.subr.bf16.mxu0 0
        %686 = vmatpush2.bf16.msra.mxu0 %v643
        %687 = vmatprep.subr.bf16.mxu0 0
        %688 = vmatpush2.bf16.msra.mxu0 %v642
        %689 = vmatprep.subr.bf16.mxu0 0
        %690 = vmatpush2.bf16.msra.mxu0 %v641
        %691 = vmatprep.subr.bf16.mxu0 0
        %692 = vmatpush2.bf16.msra.mxu0 %v640
        %693 = vmatprep.subr.bf16.mxu0 0
        %694 = vmatpush2.bf16.msra.mxu0 %v639
        %695 = vmatprep.mubr.bf16.mxu0 %v552
        %696 = vmatmul.mubr.bf16.gmra.mxu0 %v551
        %v697 = vpop.f32.mrf.mxu0
        %v698 = vadd.f32 %v525, %v697
        %v699 = vpop.f32.mrf.mxu0
        %v700 = vpop.f32.mrf.mxu0
        %v701 = vadd.f32 %v525, %v700
        %v702 = vpop.f32.mrf.mxu0
        %703 = vmatprep.mubr.bf16.mxu0 %v554
        %704 = vmatmul.mubr.bf16.gmra.mxu0 %v553
        %v705 = vpop.f32.mrf.mxu0
        %v706 = vadd.f32 %v525, %v705
        %v707 = vpop.f32.mrf.mxu0
        %v708 = vpop.f32.mrf.mxu0
        %v709 = vadd.f32 %v525, %v708
        %v710 = vpop.f32.mrf.mxu0
        %711 = vmatprep.mubr.bf16.mxu0 %v556
        %712 = vmatmul.mubr.bf16.gmra.mxu0 %v555
        %v713 = vpop.f32.mrf.mxu0
        %v714 = vadd.f32 %v525, %v713
        %v715 = vpop.f32.mrf.mxu0
        %v716 = vpop.f32.mrf.mxu0
        %v717 = vadd.f32 %v525, %v716
        %v718 = vpop.f32.mrf.mxu0
        %719 = vmatprep.mubr.bf16.mxu0 %v558
        %720 = vmatmul.mubr.bf16.gmra.mxu0 %v557
        %v721 = vpop.f32.mrf.mxu0
        %v722 = vadd.f32 %v525, %v721
        %v723 = vpop.f32.mrf.mxu0
        %v724 = vpop.f32.mrf.mxu0
        %v725 = vadd.f32 %v525, %v724
        %v726 = vpop.f32.mrf.mxu0
        %727 = vdwg.mxu0
        %p728 = scmp.ne.s32.totalorder %s18, 2
        // Predicated region
        $region53: #{tpu_custom_call.1} parent=35 // pred_check
          %p729 = pneg %p728
        $region54: #{tpu_custom_call.1} parent=35 // pred_check_branch
          %731 = sbr.rel (%p729) target = $region56
        $region55: #{tpu_custom_call.1} parent=35 // pred_region
          %vm732 = vcmp.gt.f32.partialorder %v698, 0.0
          %vm733 = vcmp.gt.f32.partialorder %v701, 0.0
          %vm734 = vcmp.gt.f32.partialorder %v706, 0.0
          %vm735 = vcmp.gt.f32.partialorder %v709, 0.0
          %vm736 = vcmp.gt.f32.partialorder %v714, 0.0
          %vm737 = vcmp.gt.f32.partialorder %v717, 0.0
          %vm738 = vcmp.gt.f32.partialorder %v722, 0.0
          %vm739 = vcmp.gt.f32.partialorder %v725, 0.0
          %v740 = vmul.f32 %v698, 0.2
          %v741 = vmul.f32 %v701, 0.2
          %v742 = vmul.f32 %v706, 0.2
          %v743 = vmul.f32 %v709, 0.2
          %v744 = vmul.f32 %v714, 0.2
          %v745 = vmul.f32 %v717, 0.2
          %v746 = vmul.f32 %v722, 0.2
          %v747 = vmul.f32 %v725, 0.2
          %v748 = vsel %vm732, %v698, %v740
          %v749 = vsel %vm733, %v701, %v741
          %v750 = vsel %vm734, %v706, %v742
          %v751 = vsel %vm735, %v709, %v743
          %v752 = vsel %vm736, %v714, %v744
          %v753 = vsel %vm737, %v717, %v745
          %v754 = vsel %vm738, %v722, %v746
          %v755 = vsel %vm739, %v725, %v747
          %756 = vst [vmem:[#allocation9] sm:$0xff] %v748
          %757 = vst [vmem:[#allocation9 + $0x8] sm:$0xff] %v749
          %758 = vst [vmem:[#allocation9 + $0x10] sm:$0xff] %v750
          %759 = vst [vmem:[#allocation9 + $0x18] sm:$0xff] %v751
          %760 = vst [vmem:[#allocation9 + $0x20] sm:$0xff] %v752
          %761 = vst [vmem:[#allocation9 + $0x28] sm:$0xff] %v753
          %762 = vst [vmem:[#allocation9 + $0x30] sm:$0xff] %v754
          %763 = vst [vmem:[#allocation9 + $0x38] sm:$0xff] %v755
        $region56: #{tpu_custom_call.1} parent=35 // pred_fallthru
          _
        %p764 = scmp.eq.s32.totalorder %s18, 2
        // Predicated region
        $region57: #{tpu_custom_call.1} parent=35 // pred_check
          %p765 = pneg %p764
        $region58: #{tpu_custom_call.1} parent=35 // pred_check_branch
          %767 = sbr.rel (%p765) target = $region60
        $region59: #{tpu_custom_call.1} parent=35 // pred_region
          %768 = vst [vmem:[#allocation9] sm:$0xff] %v698
          %769 = vst [vmem:[#allocation9 + $0x8] sm:$0xff] %v701
          %770 = vst [vmem:[#allocation9 + $0x10] sm:$0xff] %v706
          %771 = vst [vmem:[#allocation9 + $0x18] sm:$0xff] %v709
          %772 = vst [vmem:[#allocation9 + $0x20] sm:$0xff] %v714
          %773 = vst [vmem:[#allocation9 + $0x28] sm:$0xff] %v717
          %774 = vst [vmem:[#allocation9 + $0x30] sm:$0xff] %v722
          %775 = vst [vmem:[#allocation9 + $0x38] sm:$0xff] %v725
        $region60: #{tpu_custom_call.1} parent=35 // pred_fallthru
          _
        // Predicated region
        $region61: #{tpu_custom_call.1} parent=35 // pred_check
          %p776 = pneg %p125
        $region62: #{tpu_custom_call.1} parent=35 // pred_check_branch
          %778 = sbr.rel (%p776) target = $region64
        $region63: #{tpu_custom_call.1} parent=35 // pred_region
          %s780 = ssub.s32 1024, 1024
          %781 = vsyncadd [#allocation5], %s780
          %s782 = sshll.u32 [#allocation9], 4
          %s783 = int_to_ptr.vmem [resolvable:$true] %s782
          %788 = dma.vmem_to_hbm [thread:$0]  %s783, 1024, %s4, [#allocation5], 128, 128, 8
        $region64: #{tpu_custom_call.1} parent=35 // pred_fallthru
          _
        // Predicated region
        $region65: #{tpu_custom_call.1} parent=35 // pred_check
          %p789 = pneg %p125
        $region66: #{tpu_custom_call.1} parent=35 // pred_check_branch
          %791 = sbr.rel (%p789) target = $region68
        $region67: #{tpu_custom_call.1} parent=35 // pred_region
          %792 = dma.done [#allocation5], 1024
        $region68: #{tpu_custom_call.1} parent=35 // pred_fallthru
          _
      $region36: #{tpu_custom_call.1} parent=5 // pred_fallthru
        _
      %p793 = scmp.le.s32.totalorder 2, %s13
      // Predicated region
      $region69: #{tpu_custom_call.1} parent=5 // pred_check
        %p794 = pneg %p793
      $region70: #{tpu_custom_call.1} parent=5 // pred_check_branch
        %796 = sbr.rel (%p794) target = $region72
      $region71: #{tpu_custom_call.1} parent=5 // pred_region
        %s797 = ssub.s32 %s13, 2
      $region72: #{tpu_custom_call.1} parent=5 // pred_fallthru
        _
    $region6: #{tpu_custom_call.1} parent=1 // loop_footer
      %s17 = sadd.s32 1, %s13
    $region7: #{tpu_custom_call.1} parent=1 // loop_footer_branch
      %12 = sbr.rel target = $region3
    $region8: #{tpu_custom_call.1} parent=1 // loop_exit
      _
    %798 = vsyncpa [#allocation4], 1
    %s799 = scalar_lea.sflag [#allocation4], 1
    %800 = vsyncpa %s799, 1
    %801 = vsyncpa [#allocation7], 1
    %802 = vsyncpa [#allocation5], 1
    %s803 = scalar_lea.sflag [#allocation5], 1
    %804 = vsyncpa %s803, 1

// kernel: tpu_custom_call.1
$region0: #{tpu_custom_call.1}
  #allocation0 [shape = 'u32[]', space=smem, size = 0x4, offset = 0x4, fixed_abs, tag = 'smem constant byte address 0x4 - core index']
  #allocation1 [shape = 'u32[144,128]{1,0:T(1,128)}', space=vmem, size = 0x12000, scoped, tag = 'internal scratch']
  #allocation2 [shape = 'bf16[64,256]{1,0:T(8,128)(2,1)}', space=vmem, size = 0x8000, scoped, tag = 'scratch operand']
  %s0 = inlined_call_operand.hbm [shape: bf16[64,64], index: 0, kind: input, shape index: {}]
  %s1 = inlined_call_operand.hbm [shape: f32[64,128], index: 1, kind: input, shape index: {}]
  %s2 = inlined_call_operand.hbm [shape: bf16[3,256,128], index: 2, kind: input, shape index: {}]
  %s3 = inlined_call_operand.vmem [shape: f32[3,1,128], index: 3, kind: input, shape index: {}]
  %s4 = inlined_call_operand.hbm [shape: f32[64,128], index: 4, kind: output, shape index: {}]
  %s5 = sld [smem:[#allocation0]]
  $region73: #{tpu_custom_call.1} parent=0
    _
  %s7 = ssub.s32 1, %s5
  %s8 = scalar_select 0, %s7, %s5
  $region1: #{tpu_custom_call.1} parent=0
    #allocation3 [shape = 'u8[16384]{0}', space=vmem, size = 0x4000, scoped, tag = 'input window, operand 0, single buffered']
    #allocation4 [shape = 's32[2]{0}', space=sflag, size = 0x8, scoped, tag = 'scoped memory for tpu_custom_call.1']
    #allocation5 [shape = 's32[2]{0}', space=sflag, size = 0x8, scoped, tag = 'scoped memory for tpu_custom_call.1']
    #allocation6 [shape = 'u8[32768]{0}', space=vmem, size = 0x8000, scoped, tag = 'input window, operand 1, single buffered']
    #allocation7 [shape = 's32[1]{0}', space=sflag, size = 0x4, scoped, tag = 'scoped memory for tpu_custom_call.1']
    #allocation8 [shape = 'u8[131072]{0}', space=vmem, size = 0x20000, scoped, tag = 'input window, operand 2']
    #allocation9 [shape = 'u8[32768]{0}', space=vmem, size = 0x8000, scoped, tag = 'output window, operand 0, single buffered']
    %9 = vsyncpa [#allocation4], 0
    %10 = vsyncpa [#allocation7], 0
    %11 = vsyncpa [#allocation5], 0
    loop: start=0, step=1, limit=5
    $region2: #{tpu_custom_call.1} parent=1 // loop_pre_header
      _
    $region3: #{tpu_custom_call.1} parent=1 // loop_header
      %s13 = sphi 0, %s17
      %p14 = scmp.ge.s32.totalorder %s13, 5
      %s21 = sphi 0, %s21
      %s23 = sphi 0, %s21
      %s24 = sphi 0, %s23
      %s38 = sphi 0, %s24
      %s42 = sphi 0, %s42
      %s44 = sphi 0, %s42
      %s45 = sphi 0, %s44
      %s59 = sphi 0, %s45
      %s65 = sphi 0, %s67
      %s68 = sphi 0, %s65
      %s69 = sphi 0, %s68
      %s85 = sphi 0, %s69
      %s91 = sphi 0, %s93
      %s94 = sphi 0, %s91
      %s95 = sphi 0, %s94
      %s111 = sphi 0, %s95
      %s115 = sphi 0, %s115
      %s117 = sphi 0, %s115
      %s118 = sphi 0, %s117
      %s132 = sphi 0, %s118
    $region4: #{tpu_custom_call.1} parent=1 // loop_header_branch
      %16 = sbr.rel (%p14) target = $region8
    $region5: #{tpu_custom_call.1} parent=1 // loop_body
      %s18 = ssub.s32 %s13, 1
      %s19 = ssub.s32 %s13, 2
      %s20 = sadd.s32 %s13, 1
      %s22 = sadd.s32 %s21, 1
      %p25 = scmp.eq.s32.totalorder %s13, 2
      %p26 = scmp.ne.s32.totalorder %s21, %s23
      %p27 = scmp.eq.s32.totalorder %s13, 0
      %p28 = por %p26, %p27
      %p29 = scmp.ne.s32.totalorder %s21, %s23
      %p30 = scmp.eq.s32.totalorder %s18, 2
      %p31 = por %p29, %p30
      %p32 = scmp.ne.s32.totalorder %s23, %s24
      %p33 = scmp.eq.s32.totalorder %s18, 0
      %p34 = por %p32, %p33
      %p35 = scmp.ne.s32.totalorder %s23, %s24
      %p36 = scmp.eq.s32.totalorder %s19, 2
      %p37 = por %p35, %p36
      %p39 = scmp.ne.s32.totalorder %s24, %s38
      %p40 = scmp.eq.s32.totalorder %s19, 0
      %p41 = por %p39, %p40
      %s43 = sadd.s32 %s42, 1
      %p46 = scmp.eq.s32.totalorder %s13, 2
      %p47 = scmp.ne.s32.totalorder %s42, %s44
      %p48 = scmp.eq.s32.totalorder %s13, 0
      %p49 = por %p47, %p48
      %p50 = scmp.ne.s32.totalorder %s42, %s44
      %p51 = scmp.eq.s32.totalorder %s18, 2
      %p52 = por %p50, %p51
      %p53 = scmp.ne.s32.totalorder %s44, %s45
      %p54 = scmp.eq.s32.totalorder %s18, 0
      %p55 = por %p53, %p54
      %p56 = scmp.ne.s32.totalorder %s44, %s45
      %p57 = scmp.eq.s32.totalorder %s19, 2
      %p58 = por %p56, %p57
      %p60 = scmp.ne.s32.totalorder %s45, %s59
      %p61 = scmp.eq.s32.totalorder %s19, 0
      %p62 = por %p60, %p61
      %s63 = ssub.s32 %s13, %s20
      %p64 = scmp.eq.s32.totalorder %s63, 0
      %s66 = sadd.s32 %s65, 1
      %s67 = scalar_select %p64, %s65, %s66
      %p70 = pneg %p64
      %p71 = scmp.eq.s32.totalorder %s13, 2
      %p72 = por %p70, %p71
      %p73 = scmp.ne.s32.totalorder %s65, %s68
      %p74 = scmp.eq.s32.totalorder %s13, 0
      %p75 = por %p73, %p74
      %p76 = scmp.ne.s32.totalorder %s65, %s68
      %p77 = scmp.eq.s32.totalorder %s18, 2
      %p78 = por %p76, %p77
      %p79 = scmp.ne.s32.totalorder %s68, %s69
      %p80 = scmp.eq.s32.totalorder %s18, 0
      %p81 = por %p79, %p80
      %p82 = scmp.ne.s32.totalorder %s68, %s69
      %p83 = scmp.eq.s32.totalorder %s19, 2
      %p84 = por %p82, %p83
      %p86 = scmp.ne.s32.totalorder %s69, %s85
      %p87 = scmp.eq.s32.totalorder %s19, 0
      %p88 = por %p86, %p87
      %s89 = ssub.s32 %s13, %s20
      %p90 = scmp.eq.s32.totalorder %s89, 0
      %s92 = sadd.s32 %s91, 1
      %s93 = scalar_select %p90, %s91, %s92
      %p96 = pneg %p90
      %p97 = scmp.eq.s32.totalorder %s13, 2
      %p98 = por %p96, %p97
      %p99 = scmp.ne.s32.totalorder %s91, %s94
      %p100 = scmp.eq.s32.totalorder %s13, 0
      %p101 = por %p99, %p100
      %p102 = scmp.ne.s32.totalorder %s91, %s94
      %p103 = scmp.eq.s32.totalorder %s18, 2
      %p104 = por %p102, %p103
      %p105 = scmp.ne.s32.totalorder %s94, %s95
      %p106 = scmp.eq.s32.totalorder %s18, 0
      %p107 = por %p105, %p106
      %p108 = scmp.ne.s32.totalorder %s94, %s95
      %p109 = scmp.eq.s32.totalorder %s19, 2
      %p110 = por %p108, %p109
      %p112 = scmp.ne.s32.totalorder %s95, %s111
      %p113 = scmp.eq.s32.totalorder %s19, 0
      %p114 = por %p112, %p113
      %s116 = sadd.s32 %s115, 1
      %p119 = scmp.eq.s32.totalorder %s13, 2
      %p120 = scmp.ne.s32.totalorder %s115, %s117
      %p121 = scmp.eq.s32.totalorder %s13, 0
      %p122 = por %p120, %p121
      %p123 = scmp.ne.s32.totalorder %s115, %s117
      %p124 = scmp.eq.s32.totalorder %s18, 2
      %p125 = por %p123, %p124
      %p126 = scmp.ne.s32.totalorder %s117, %s118
      %p127 = scmp.eq.s32.totalorder %s18, 0
      %p128 = por %p126, %p127
      %p129 = scmp.ne.s32.totalorder %s117, %s118
      %p130 = scmp.eq.s32.totalorder %s19, 2
      %p131 = por %p129, %p130
      %p133 = scmp.ne.s32.totalorder %s118, %s132
      %p134 = scmp.eq.s32.totalorder %s19, 0
      %p135 = por %p133, %p134
      %p136 = scmp.le.s32.totalorder 1, %s13
      %p137 = scmp.lt.s32.totalorder %s13, 4
      %p138 = pnand %p136, %p137
      %p139 = pneg %p138
      // Predicated region
      $region9: #{tpu_custom_call.1} parent=5 // pred_check
        _
      $region10: #{tpu_custom_call.1} parent=5 // pred_check_branch
        %141 = sbr.rel (%p138) target = $region12
      $region11: #{tpu_custom_call.1} parent=5 // pred_region
        %s142 = ssub.s32 %s13, 1
        // Predicated region
        $region13: #{tpu_custom_call.1} parent=11 // pred_check
          %p143 = pneg %p34
        $region14: #{tpu_custom_call.1} parent=11 // pred_check_branch
          %145 = sbr.rel (%p143) target = $region16
        $region15: #{tpu_custom_call.1} parent=11 // pred_region
          %s147 = ssub.s32 512, 512
          %148 = vsyncadd [#allocation4], %s147
          %s149 = sshll.u32 [#allocation3], 4
          %s150 = int_to_ptr.vmem [resolvable:$true] %s149
          %155 = dma.hbm_to_vmem [thread:$0]  %s0, 512, %s150, [#allocation4], 64, 64, 4
        $region16: #{tpu_custom_call.1} parent=11 // pred_fallthru
          _
        // Predicated region
        $region17: #{tpu_custom_call.1} parent=11 // pred_check
          %p156 = pneg %p55
        $region18: #{tpu_custom_call.1} parent=11 // pred_check_branch
          %158 = sbr.rel (%p156) target = $region20
        $region19: #{tpu_custom_call.1} parent=11 // pred_region
          %s160 = ssub.s32 1024, 1024
          %161 = vsyncadd [#allocation7], %s160
          %s162 = sshll.u32 [#allocation6], 4
          %s163 = int_to_ptr.vmem [resolvable:$true] %s162
          %168 = dma.hbm_to_vmem [thread:$0]  %s1, 1024, %s163, [#allocation7], 128, 128, 8
        $region20: #{tpu_custom_call.1} parent=11 // pred_fallthru
          _
      $region12: #{tpu_custom_call.1} parent=5 // pred_fallthru
        _
      %p169 = scmp.lt.s32.totalorder %s13, 3
      // Predicated region
      $region21: #{tpu_custom_call.1} parent=5 // pred_check
        %p170 = pneg %p169
      $region22: #{tpu_custom_call.1} parent=5 // pred_check_branch
        %172 = sbr.rel (%p170) target = $region24
      $region23: #{tpu_custom_call.1} parent=5 // pred_region
        // Predicated region
        $region25: #{tpu_custom_call.1} parent=23 // pred_check
          %p173 = pneg %p75
        $region26: #{tpu_custom_call.1} parent=23 // pred_check_branch
          %175 = sbr.rel (%p173) target = $region28
        $region27: #{tpu_custom_call.1} parent=23 // pred_region
          %s176 = sand.u32 %s13, 1
          %s177 = scalar_lea.sflag [#allocation4], %s176
          %s178 = sand.u32 %s65, 1
          %s179 = smul.addr %s178, 128
          %s180 = scalar_lea.vmem [#allocation8], %s179
          %s182 = ssub.s32 2048, 2048
          %183 = vsyncadd %s177, %s182
          %s184 = smul.addr %s13, 32
          %s185 = smul.addr %s184, 64
          %s186 = scalar_lea.hbm %s2, %s185
          %s187 = sshll.u32 %s180, 4
          %s188 = int_to_ptr.vmem [resolvable:$true] %s187
          %193 = dma.hbm_to_vmem [thread:$0]  %s186, 2048, %s188, %s177, 64, 64, 4
        $region28: #{tpu_custom_call.1} parent=23 // pred_fallthru
          _
        // Predicated region
        $region29: #{tpu_custom_call.1} parent=23 // pred_check
          %p194 = pneg %p101
        $region30: #{tpu_custom_call.1} parent=23 // pred_check_branch
          %196 = sbr.rel (%p194) target = $region32
        $region31: #{tpu_custom_call.1} parent=23 // pred_region
          %p197 = scmp.lt.s32.totalorder %s13, 2
          %s198 = scalar_select %p197, %s13, 2
          %s199 = scalar_lea.vmem %s3, %s198
        $region32: #{tpu_custom_call.1} parent=23 // pred_fallthru
          _
      $region24: #{tpu_custom_call.1} parent=5 // pred_fallthru
        _
      %p200 = scmp.le.s32.totalorder 1, %s13
      %p201 = scmp.lt.s32.totalorder %s13, 4
      %p202 = pnand %p200, %p201
      %p203 = pneg %p202
      // Predicated region
      $region33: #{tpu_custom_call.1} parent=5 // pred_check
        _
      $region34: #{tpu_custom_call.1} parent=5 // pred_check_branch
        %205 = sbr.rel (%p202) target = $region36
      $region35: #{tpu_custom_call.1} parent=5 // pred_region
        %s206 = ssub.s32 %s13, 1
        // Predicated region
        $region37: #{tpu_custom_call.1} parent=35 // pred_check
          %p207 = pneg %p34
        $region38: #{tpu_custom_call.1} parent=35 // pred_check_branch
          %209 = sbr.rel (%p207) target = $region40
        $region39: #{tpu_custom_call.1} parent=35 // pred_region
          %210 = dma.done [#allocation4], 512
        $region40: #{tpu_custom_call.1} parent=35 // pred_fallthru
          _
        // Predicated region
        $region41: #{tpu_custom_call.1} parent=35 // pred_check
          %p211 = pneg %p55
        $region42: #{tpu_custom_call.1} parent=35 // pred_check_branch
          %213 = sbr.rel (%p211) target = $region44
        $region43: #{tpu_custom_call.1} parent=35 // pred_region
          %214 = dma.done [#allocation7], 1024
        $region44: #{tpu_custom_call.1} parent=35 // pred_fallthru
          _
        %s215 = sand.u32 %s18, 1
        %s216 = scalar_lea.sflag [#allocation4], %s215
        %s217 = sand.u32 %s68, 1
        %s218 = smul.addr %s217, 128
        %s219 = scalar_lea.vmem [#allocation8], %s218
        // Predicated region
        $region45: #{tpu_custom_call.1} parent=35 // pred_check
          %p220 = pneg %p81
        $region46: #{tpu_custom_call.1} parent=35 // pred_check_branch
          %222 = sbr.rel (%p220) target = $region48
        $region47: #{tpu_custom_call.1} parent=35 // pred_region
          %223 = dma.done %s216, 2048
        $region48: #{tpu_custom_call.1} parent=35 // pred_fallthru
          _
        %p224 = pneg %p34
        %p225 = pneg %p31
        %p226 = pneg %p55
        %p227 = pneg %p52
        %s228 = sand.u32 %s18, 1
        %s229 = scalar_lea.sflag [#allocation4], %s228
        %s230 = sand.u32 %s68, 1
        %s231 = smul.addr %s230, 128
        %s232 = scalar_lea.vmem [#allocation8], %s231
        %p233 = pneg %p81
        %p234 = pneg %p78
        %p235 = scmp.lt.s32.totalorder %s18, 2
        %s236 = scalar_select %p235, %s18, 2
        %s237 = scalar_lea.vmem %s3, %s236
        %p238 = pneg %p107
        %p239 = pneg %p104
        %p240 = pneg %p128
        %p241 = pneg %p125
        %p242 = scmp.lt.s32.totalorder %s18, 2
        %s243 = scalar_select %p242, %s18, 2
        %s244 = scalar_lea.vmem %s3, %s243
        %p246 = scmp.eq.s32.totalorder %s18, 0
        // Predicated region
        $region49: #{tpu_custom_call.1} parent=35 // pred_check
          %p247 = pneg %p246
        $region50: #{tpu_custom_call.1} parent=35 // pred_check_branch
          %249 = sbr.rel (%p247) target = $region52
        $region51: #{tpu_custom_call.1} parent=35 // pred_region
          %v250 = vld [vmem:[#allocation6] sm:$0xff]
          %v251 = vld [vmem:[#allocation6 + $0x8] sm:$0xff]
          %v252 = vld [vmem:[#allocation6 + $0x10] sm:$0xff]
          %v253 = vld [vmem:[#allocation6 + $0x18] sm:$0xff]
          %v254 = vld [vmem:[#allocation6 + $0x20] sm:$0xff]
          %v255 = vld [vmem:[#allocation6 + $0x28] sm:$0xff]
          %v256 = vld [vmem:[#allocation6 + $0x30] sm:$0xff]
          %v257 = vld [vmem:[#allocation6 + $0x38] sm:$0xff]
          %258 = vst [vmem:[#allocation9] sm:$0xff] %v250
          %259 = vst [vmem:[#allocation9 + $0x8] sm:$0xff] %v251
          %260 = vst [vmem:[#allocation9 + $0x10] sm:$0xff] %v252
          %261 = vst [vmem:[#allocation9 + $0x18] sm:$0xff] %v253
          %262 = vst [vmem:[#allocation9 + $0x20] sm:$0xff] %v254
          %263 = vst [vmem:[#allocation9 + $0x28] sm:$0xff] %v255
          %264 = vst [vmem:[#allocation9 + $0x30] sm:$0xff] %v256
          %265 = vst [vmem:[#allocation9 + $0x38] sm:$0xff] %v257
        $region52: #{tpu_custom_call.1} parent=35 // pred_fallthru
          _
        %v266 = vld [vmem:[#allocation9] sm:$0xff]
        %v267 = vld [vmem:[#allocation9 + $0x8] sm:$0xff]
        %v268 = vld [vmem:[#allocation9 + $0x10] sm:$0xff]
        %v269 = vld [vmem:[#allocation9 + $0x18] sm:$0xff]
        %v270 = vld [vmem:[#allocation9 + $0x20] sm:$0xff]
        %v271 = vld [vmem:[#allocation9 + $0x28] sm:$0xff]
        %v272 = vld [vmem:[#allocation9 + $0x30] sm:$0xff]
        %v273 = vld [vmem:[#allocation9 + $0x38] sm:$0xff]
        %v274 = vld [vmem:[#allocation3] sm:$0xf]
        %v275 = vld [vmem:[#allocation3 + $0x4] sm:$0xf]
        %v276 = vld [vmem:[#allocation3 + $0x8] sm:$0xf]
        %v277 = vld [vmem:[#allocation3 + $0xc] sm:$0xf]
        %v278 = vld [vmem:[#allocation3 + $0x10] sm:$0xf]
        %v279 = vld [vmem:[#allocation3 + $0x14] sm:$0xf]
        %v280 = vld [vmem:[#allocation3 + $0x18] sm:$0xf]
        %v281 = vld [vmem:[#allocation3 + $0x1c] sm:$0xf]
        %v282 = vpack.c.bf16 %v267, %v266
        %v283 = vpack.c.bf16 %v269, %v268
        %v284 = vpack.c.bf16 %v271, %v270
        %v285 = vpack.c.bf16 %v273, %v272
        %v294 = vunpack.c.l.b16 %v274
        %v295 = vunpack.c.l.b16 %v275
        %v296 = vunpack.c.l.b16 %v276
        %v297 = vunpack.c.l.b16 %v277
        %v298 = vunpack.c.l.b16 %v278
        %v299 = vunpack.c.l.b16 %v279
        %v300 = vunpack.c.l.b16 %v280
        %v301 = vunpack.c.l.b16 %v281
        %v302 = vpack.c.b16 %v295, %v294
        %v303 = vpack.c.b16 %v297, %v296
        %v304 = vpack.c.b16 %v299, %v298
        %v305 = vpack.c.b16 %v301, %v300
        %vm306 = vcmask 523264
        %v308 = vsel %vm306, %v302, 0
        %v311 = vsel %vm306, %v303, 0
        %v314 = vsel %vm306, %v304, 0
        %v317 = vsel %vm306, %v305, 0
        %319 = vmatprep.subr.bf16.mxu0 0
        %320 = vmatpush1.bf16.msra.mxu0 0
        %321 = vmatprep.subr.bf16.mxu0 0
        %322 = vmatpush1.bf16.msra.mxu0 0
        %323 = vmatprep.subr.bf16.mxu0 0
        %324 = vmatpush1.bf16.msra.mxu0 0
        %325 = vmatprep.subr.bf16.mxu0 0
        %326 = vmatpush1.bf16.msra.mxu0 0
        %327 = vmatprep.subr.bf16.mxu0 0
        %328 = vmatpush1.bf16.msra.mxu0 %v285
        %329 = vmatprep.subr.bf16.mxu0 0
        %330 = vmatpush1.bf16.msra.mxu0 %v284
        %331 = vmatprep.subr.bf16.mxu0 0
        %332 = vmatpush1.bf16.msra.mxu0 %v283
        %333 = vmatprep.subr.bf16.mxu0 0
        %334 = vmatpush1.bf16.msra.mxu0 %v282
        %335 = vmatprep.subr.bf16.mxu0 0
        %336 = vmatpush2.bf16.msra.mxu0 0
        %337 = vmatprep.subr.bf16.mxu0 0
        %338 = vmatpush2.bf16.msra.mxu0 0
        %339 = vmatprep.subr.bf16.mxu0 0
        %340 = vmatpush2.bf16.msra.mxu0 0
        %341 = vmatprep.subr.bf16.mxu0 0
        %342 = vmatpush2.bf16.msra.mxu0 0
        %343 = vmatprep.subr.bf16.mxu0 0
        %344 = vmatpush2.bf16.msra.mxu0 0
        %345 = vmatprep.subr.bf16.mxu0 0
        %346 = vmatpush2.bf16.msra.mxu0 0
        %347 = vmatprep.subr.bf16.mxu0 0
        %348 = vmatpush2.bf16.msra.mxu0 0
        %349 = vmatprep.subr.bf16.mxu0 0
        %350 = vmatpush2.bf16.msra.mxu0 0
        %351 = vmatprep.mubr.bf16.mxu0 0
        %352 = vmatmul.mubr.bf16.gmra.mxu0 %v308
        %v353 = vpop.f32.mrf.mxu0
        %v354 = vadd.f32 0.0, %v353
        %v355 = vpop.f32.mrf.mxu0
        %v356 = vpop.f32.mrf.mxu0
        %v357 = vadd.f32 0.0, %v356
        %v358 = vpop.f32.mrf.mxu0
        %359 = vmatprep.mubr.bf16.mxu0 0
        %360 = vmatmul.mubr.bf16.gmra.mxu0 %v311
        %v361 = vpop.f32.mrf.mxu0
        %v362 = vadd.f32 0.0, %v361
        %v363 = vpop.f32.mrf.mxu0
        %v364 = vpop.f32.mrf.mxu0
        %v365 = vadd.f32 0.0, %v364
        %v366 = vpop.f32.mrf.mxu0
        %367 = vmatprep.mubr.bf16.mxu0 0
        %368 = vmatmul.mubr.bf16.gmra.mxu0 %v314
        %v369 = vpop.f32.mrf.mxu0
        %v370 = vadd.f32 0.0, %v369
        %v371 = vpop.f32.mrf.mxu0
        %v372 = vpop.f32.mrf.mxu0
        %v373 = vadd.f32 0.0, %v372
        %v374 = vpop.f32.mrf.mxu0
        %375 = vmatprep.mubr.bf16.mxu0 0
        %376 = vmatmul.mubr.bf16.gmra.mxu0 %v317
        %v377 = vpop.f32.mrf.mxu0
        %v378 = vadd.f32 0.0, %v377
        %v379 = vpop.f32.mrf.mxu0
        %v380 = vpop.f32.mrf.mxu0
        %v381 = vadd.f32 0.0, %v380
        %v382 = vpop.f32.mrf.mxu0
        %383 = vdwg.mxu0
        %v384 = vadd.f32 %v266, %v354
        %v385 = vadd.f32 %v267, %v357
        %v386 = vadd.f32 %v268, %v362
        %v387 = vadd.f32 %v269, %v365
        %v388 = vadd.f32 %v270, %v370
        %v389 = vadd.f32 %v271, %v373
        %v390 = vadd.f32 %v272, %v378
        %v391 = vadd.f32 %v273, %v381
        %v392 = vpack.c.bf16 %v385, %v384
        %v393 = vpack.c.bf16 %v387, %v386
        %v394 = vpack.c.bf16 %v389, %v388
        %v395 = vpack.c.bf16 %v391, %v390
        %v400 = vunpack.c.l.b16 %v392
        %v401 = vunpack.c.h.b16 %v392
        %v402 = vunpack.c.l.b16 %v393
        %v403 = vunpack.c.h.b16 %v393
        %v404 = vunpack.c.l.b16 %v394
        %v405 = vunpack.c.h.b16 %v394
        %v406 = vunpack.c.l.b16 %v395
        %v407 = vunpack.c.h.b16 %v395
        %v408 = vpack.c.b16 %v400, %v400
        %v409 = vpack.c.b16 %v401, %v401
        %v410 = vpack.c.b16 %v402, %v402
        %v411 = vpack.c.b16 %v403, %v403
        %v412 = vpack.c.b16 %v404, %v404
        %v413 = vpack.c.b16 %v405, %v405
        %v414 = vpack.c.b16 %v406, %v406
        %v415 = vpack.c.b16 %v407, %v407
        %424 = vst [vmem:[#allocation2] sm:$0xf] %v408
        %425 = vst [vmem:[#allocation2 + $0x8] sm:$0xf] %v409
        %426 = vst [vmem:[#allocation2 + $0x10] sm:$0xf] %v410
        %427 = vst [vmem:[#allocation2 + $0x18] sm:$0xf] %v411
        %428 = vst [vmem:[#allocation2 + $0x20] sm:$0xf] %v412
        %429 = vst [vmem:[#allocation2 + $0x28] sm:$0xf] %v413
        %430 = vst [vmem:[#allocation2 + $0x30] sm:$0xf] %v414
        %431 = vst [vmem:[#allocation2 + $0x38] sm:$0xf] %v415
        %v432 = vmul.f32 %v354, %v266
        %v433 = vmul.f32 %v357, %v267
        %v434 = vmul.f32 %v362, %v268
        %v435 = vmul.f32 %v365, %v269
        %v436 = vmul.f32 %v370, %v270
        %v437 = vmul.f32 %v373, %v271
        %v438 = vmul.f32 %v378, %v272
        %v439 = vmul.f32 %v381, %v273
        %v440 = vpack.c.bf16 %v433, %v432
        %v441 = vpack.c.bf16 %v435, %v434
        %v442 = vpack.c.bf16 %v437, %v436
        %v443 = vpack.c.bf16 %v439, %v438
        %v448 = vunpack.c.l.b16 %v440
        %v449 = vunpack.c.h.b16 %v440
        %v450 = vunpack.c.l.b16 %v441
        %v451 = vunpack.c.h.b16 %v441
        %v452 = vunpack.c.l.b16 %v442
        %v453 = vunpack.c.h.b16 %v442
        %v454 = vunpack.c.l.b16 %v443
        %v455 = vunpack.c.h.b16 %v443
        %v456 = vpack.c.b16 %v448, %v448
        %v457 = vpack.c.b16 %v449, %v449
        %v458 = vpack.c.b16 %v450, %v450
        %v459 = vpack.c.b16 %v451, %v451
        %v460 = vpack.c.b16 %v452, %v452
        %v461 = vpack.c.b16 %v453, %v453
        %v462 = vpack.c.b16 %v454, %v454
        %v463 = vpack.c.b16 %v455, %v455
        %472 = vst [vmem:[#allocation2 + $0x4] sm:$0xf] %v456
        %473 = vst [vmem:[#allocation2 + $0xc] sm:$0xf] %v457
        %474 = vst [vmem:[#allocation2 + $0x14] sm:$0xf] %v458
        %475 = vst [vmem:[#allocation2 + $0x1c] sm:$0xf] %v459
        %476 = vst [vmem:[#allocation2 + $0x24] sm:$0xf] %v460
        %477 = vst [vmem:[#allocation2 + $0x2c] sm:$0xf] %v461
        %478 = vst [vmem:[#allocation2 + $0x34] sm:$0xf] %v462
        %479 = vst [vmem:[#allocation2 + $0x3c] sm:$0xf] %v463
        %v480 = vld [vmem:[#allocation2] sm:$0xff]
        %v481 = vld [vmem:[#allocation2 + $0x8] sm:$0xff]
        %v482 = vld [vmem:[#allocation2 + $0x10] sm:$0xff]
        %v483 = vld [vmem:[#allocation2 + $0x18] sm:$0xff]
        %v484 = vld [vmem:[#allocation2 + $0x20] sm:$0xff]
        %v485 = vld [vmem:[#allocation2 + $0x28] sm:$0xff]
        %v486 = vld [vmem:[#allocation2 + $0x30] sm:$0xff]
        %v487 = vld [vmem:[#allocation2 + $0x38] sm:$0xff]
        %v488 = vld [vmem:[%s219] sm:$0xf]
        %v489 = vld [vmem:[%s219 + $0x4] sm:$0xf]
        %v490 = vld [vmem:[%s219 + $0x8] sm:$0xf]
        %v491 = vld [vmem:[%s219 + $0xc] sm:$0xf]
        %v492 = vld [vmem:[%s219 + $0x10] sm:$0xf]
        %v493 = vld [vmem:[%s219 + $0x14] sm:$0xf]
        %v494 = vld [vmem:[%s219 + $0x18] sm:$0xf]
        %v495 = vld [vmem:[%s219 + $0x1c] sm:$0xf]
        %v496 = vld [vmem:[%s219 + $0x20] sm:$0xf]
        %v497 = vld [vmem:[%s219 + $0x24] sm:$0xf]
        %v498 = vld [vmem:[%s219 + $0x28] sm:$0xf]
        %v499 = vld [vmem:[%s219 + $0x2c] sm:$0xf]
        %v500 = vld [vmem:[%s219 + $0x30] sm:$0xf]
        %v501 = vld [vmem:[%s219 + $0x34] sm:$0xf]
        %v502 = vld [vmem:[%s219 + $0x38] sm:$0xf]
        %v503 = vld [vmem:[%s219 + $0x3c] sm:$0xf]
        %v504 = vld [vmem:[%s219 + $0x40] sm:$0xf]
        %v505 = vld [vmem:[%s219 + $0x44] sm:$0xf]
        %v506 = vld [vmem:[%s219 + $0x48] sm:$0xf]
        %v507 = vld [vmem:[%s219 + $0x4c] sm:$0xf]
        %v508 = vld [vmem:[%s219 + $0x50] sm:$0xf]
        %v509 = vld [vmem:[%s219 + $0x54] sm:$0xf]
        %v510 = vld [vmem:[%s219 + $0x58] sm:$0xf]
        %v511 = vld [vmem:[%s219 + $0x5c] sm:$0xf]
        %v512 = vld [vmem:[%s219 + $0x60] sm:$0xf]
        %v513 = vld [vmem:[%s219 + $0x64] sm:$0xf]
        %v514 = vld [vmem:[%s219 + $0x68] sm:$0xf]
        %v515 = vld [vmem:[%s219 + $0x6c] sm:$0xf]
        %v516 = vld [vmem:[%s219 + $0x70] sm:$0xf]
        %v517 = vld [vmem:[%s219 + $0x74] sm:$0xf]
        %v518 = vld [vmem:[%s219 + $0x78] sm:$0xf]
        %v519 = vld [vmem:[%s219 + $0x7c] sm:$0xf]
        %v520 = vld [vmem:[%s244] sm:$0x1]
        %v522 = vlaneseq
        %v523 = vshrl.u32 %v522, 7
        %v524 = vsub.s32 0, %v523
        %v525 = vrot.slane %v520, %v524
        %v535 = vunpack.c.l.b16 %v480
        %v536 = vunpack.c.h.b16 %v480
        %v537 = vunpack.c.l.b16 %v481
        %v538 = vunpack.c.h.b16 %v481
        %v539 = vunpack.c.l.b16 %v482
        %v540 = vunpack.c.h.b16 %v482
        %v541 = vunpack.c.l.b16 %v483
        %v542 = vunpack.c.h.b16 %v483
        %v543 = vunpack.c.l.b16 %v484
        %v544 = vunpack.c.h.b16 %v484
        %v545 = vunpack.c.l.b16 %v485
        %v546 = vunpack.c.h.b16 %v485
        %v547 = vunpack.c.l.b16 %v486
        %v548 = vunpack.c.h.b16 %v486
        %v549 = vunpack.c.l.b16 %v487
        %v550 = vunpack.c.h.b16 %v487
        %v551 = vpack.c.b16 %v537, %v535
        %v552 = vpack.c.b16 %v538, %v536
        %v553 = vpack.c.b16 %v541, %v539
        %v554 = vpack.c.b16 %v542, %v540
        %v555 = vpack.c.b16 %v545, %v543
        %v556 = vpack.c.b16 %v546, %v544
        %v557 = vpack.c.b16 %v549, %v547
        %v558 = vpack.c.b16 %v550, %v548
        %v599 = vunpack.c.l.b16 %v488
        %v600 = vunpack.c.l.b16 %v489
        %v601 = vunpack.c.l.b16 %v490
        %v602 = vunpack.c.l.b16 %v491
        %v603 = vunpack.c.l.b16 %v492
        %v604 = vunpack.c.l.b16 %v493
        %v605 = vunpack.c.l.b16 %v494
        %v606 = vunpack.c.l.b16 %v495
        %v607 = vunpack.c.l.b16 %v496
        %v608 = vunpack.c.l.b16 %v497
        %v609 = vunpack.c.l.b16 %v498
        %v610 = vunpack.c.l.b16 %v499
        %v611 = vunpack.c.l.b16 %v500
        %v612 = vunpack.c.l.b16 %v501
        %v613 = vunpack.c.l.b16 %v502
        %v614 = vunpack.c.l.b16 %v503
        %v615 = vunpack.c.l.b16 %v504
        %v616 = vunpack.c.l.b16 %v505
        %v617 = vunpack.c.l.b16 %v506
        %v618 = vunpack.c.l.b16 %v507
        %v619 = vunpack.c.l.b16 %v508
        %v620 = vunpack.c.l.b16 %v509
        %v621 = vunpack.c.l.b16 %v510
        %v622 = vunpack.c.l.b16 %v511
        %v623 = vunpack.c.l.b16 %v512
        %v624 = vunpack.c.l.b16 %v513
        %v625 = vunpack.c.l.b16 %v514
        %v626 = vunpack.c.l.b16 %v515
        %v627 = vunpack.c.l.b16 %v516
        %v628 = vunpack.c.l.b16 %v517
        %v629 = vunpack.c.l.b16 %v518
        %v630 = vunpack.c.l.b16 %v519
        %v631 = vpack.c.b16 %v600, %v599
        %v632 = vpack.c.b16 %v602, %v601
        %v633 = vpack.c.b16 %v604, %v603
        %v634 = vpack.c.b16 %v606, %v605
        %v635 = vpack.c.b16 %v608, %v607
        %v636 = vpack.c.b16 %v610, %v609
        %v637 = vpack.c.b16 %v612, %v611
        %v638 = vpack.c.b16 %v614, %v613
        %v639 = vpack.c.b16 %v616, %v615
        %v640 = vpack.c.b16 %v618, %v617
        %v641 = vpack.c.b16 %v620, %v619
        %v642 = vpack.c.b16 %v622, %v621
        %v643 = vpack.c.b16 %v624, %v623
        %v644 = vpack.c.b16 %v626, %v625
        %v645 = vpack.c.b16 %v628, %v627
        %v646 = vpack.c.b16 %v630, %v629
        %663 = vmatprep.subr.bf16.mxu0 0
        %664 = vmatpush1.bf16.msra.mxu0 %v638
        %665 = vmatprep.subr.bf16.mxu0 0
        %666 = vmatpush1.bf16.msra.mxu0 %v637
        %667 = vmatprep.subr.bf16.mxu0 0
        %668 = vmatpush1.bf16.msra.mxu0 %v636
        %669 = vmatprep.subr.bf16.mxu0 0
        %670 = vmatpush1.bf16.msra.mxu0 %v635
        %671 = vmatprep.subr.bf16.mxu0 0
        %672 = vmatpush1.bf16.msra.mxu0 %v634
        %673 = vmatprep.subr.bf16.mxu0 0
        %674 = vmatpush1.bf16.msra.mxu0 %v633
        %675 = vmatprep.subr.bf16.mxu0 0
        %676 = vmatpush1.bf16.msra.mxu0 %v632
        %677 = vmatprep.subr.bf16.mxu0 0
        %678 = vmatpush1.bf16.msra.mxu0 %v631
        %679 = vmatprep.subr.bf16.mxu0 0
        %680 = vmatpush2.bf16.msra.mxu0 %v646
        %681 = vmatprep.subr.bf16.mxu0 0
        %682 = vmatpush2.bf16.msra.mxu0 %v645
        %683 = vmatprep.subr.bf16.mxu0 0
        %684 = vmatpush2.bf16.msra.mxu0 %v644
        %685 = vmatprep.subr.bf16.mxu0 0
        %686 = vmatpush2.bf16.msra.mxu0 %v643
        %687 = vmatprep.subr.bf16.mxu0 0
        %688 = vmatpush2.bf16.msra.mxu0 %v642
        %689 = vmatprep.subr.bf16.mxu0 0
        %690 = vmatpush2.bf16.msra.mxu0 %v641
        %691 = vmatprep.subr.bf16.mxu0 0
        %692 = vmatpush2.bf16.msra.mxu0 %v640
        %693 = vmatprep.subr.bf16.mxu0 0
        %694 = vmatpush2.bf16.msra.mxu0 %v639
        %695 = vmatprep.mubr.bf16.mxu0 %v552
        %696 = vmatmul.mubr.bf16.gmra.mxu0 %v551
        %v697 = vpop.f32.mrf.mxu0
        %v698 = vadd.f32 %v525, %v697
        %v699 = vpop.f32.mrf.mxu0
        %v700 = vpop.f32.mrf.mxu0
        %v701 = vadd.f32 %v525, %v700
        %v702 = vpop.f32.mrf.mxu0
        %703 = vmatprep.mubr.bf16.mxu0 %v554
        %704 = vmatmul.mubr.bf16.gmra.mxu0 %v553
        %v705 = vpop.f32.mrf.mxu0
        %v706 = vadd.f32 %v525, %v705
        %v707 = vpop.f32.mrf.mxu0
        %v708 = vpop.f32.mrf.mxu0
        %v709 = vadd.f32 %v525, %v708
        %v710 = vpop.f32.mrf.mxu0
        %711 = vmatprep.mubr.bf16.mxu0 %v556
        %712 = vmatmul.mubr.bf16.gmra.mxu0 %v555
        %v713 = vpop.f32.mrf.mxu0
        %v714 = vadd.f32 %v525, %v713
        %v715 = vpop.f32.mrf.mxu0
        %v716 = vpop.f32.mrf.mxu0
        %v717 = vadd.f32 %v525, %v716
        %v718 = vpop.f32.mrf.mxu0
        %719 = vmatprep.mubr.bf16.mxu0 %v558
        %720 = vmatmul.mubr.bf16.gmra.mxu0 %v557
        %v721 = vpop.f32.mrf.mxu0
        %v722 = vadd.f32 %v525, %v721
        %v723 = vpop.f32.mrf.mxu0
        %v724 = vpop.f32.mrf.mxu0
        %v725 = vadd.f32 %v525, %v724
        %v726 = vpop.f32.mrf.mxu0
        %727 = vdwg.mxu0
        %p728 = scmp.ne.s32.totalorder %s18, 2
        // Predicated region
        $region53: #{tpu_custom_call.1} parent=35 // pred_check
          %p729 = pneg %p728
        $region54: #{tpu_custom_call.1} parent=35 // pred_check_branch
          %731 = sbr.rel (%p729) target = $region56
        $region55: #{tpu_custom_call.1} parent=35 // pred_region
          %vm732 = vcmp.gt.f32.partialorder %v698, 0.0
          %vm733 = vcmp.gt.f32.partialorder %v701, 0.0
          %vm734 = vcmp.gt.f32.partialorder %v706, 0.0
          %vm735 = vcmp.gt.f32.partialorder %v709, 0.0
          %vm736 = vcmp.gt.f32.partialorder %v714, 0.0
          %vm737 = vcmp.gt.f32.partialorder %v717, 0.0
          %vm738 = vcmp.gt.f32.partialorder %v722, 0.0
          %vm739 = vcmp.gt.f32.partialorder %v725, 0.0
          %v740 = vmul.f32 %v698, 0.2
          %v741 = vmul.f32 %v701, 0.2
          %v742 = vmul.f32 %v706, 0.2
          %v743 = vmul.f32 %v709, 0.2
          %v744 = vmul.f32 %v714, 0.2
          %v745 = vmul.f32 %v717, 0.2
          %v746 = vmul.f32 %v722, 0.2
          %v747 = vmul.f32 %v725, 0.2
          %v748 = vsel %vm732, %v698, %v740
          %v749 = vsel %vm733, %v701, %v741
          %v750 = vsel %vm734, %v706, %v742
          %v751 = vsel %vm735, %v709, %v743
          %v752 = vsel %vm736, %v714, %v744
          %v753 = vsel %vm737, %v717, %v745
          %v754 = vsel %vm738, %v722, %v746
          %v755 = vsel %vm739, %v725, %v747
          %756 = vst [vmem:[#allocation9] sm:$0xff] %v748
          %757 = vst [vmem:[#allocation9 + $0x8] sm:$0xff] %v749
          %758 = vst [vmem:[#allocation9 + $0x10] sm:$0xff] %v750
          %759 = vst [vmem:[#allocation9 + $0x18] sm:$0xff] %v751
          %760 = vst [vmem:[#allocation9 + $0x20] sm:$0xff] %v752
          %761 = vst [vmem:[#allocation9 + $0x28] sm:$0xff] %v753
          %762 = vst [vmem:[#allocation9 + $0x30] sm:$0xff] %v754
          %763 = vst [vmem:[#allocation9 + $0x38] sm:$0xff] %v755
        $region56: #{tpu_custom_call.1} parent=35 // pred_fallthru
          _
        %p764 = scmp.eq.s32.totalorder %s18, 2
        // Predicated region
        $region57: #{tpu_custom_call.1} parent=35 // pred_check
          %p765 = pneg %p764
        $region58: #{tpu_custom_call.1} parent=35 // pred_check_branch
          %767 = sbr.rel (%p765) target = $region60
        $region59: #{tpu_custom_call.1} parent=35 // pred_region
          %768 = vst [vmem:[#allocation9] sm:$0xff] %v698
          %769 = vst [vmem:[#allocation9 + $0x8] sm:$0xff] %v701
          %770 = vst [vmem:[#allocation9 + $0x10] sm:$0xff] %v706
          %771 = vst [vmem:[#allocation9 + $0x18] sm:$0xff] %v709
          %772 = vst [vmem:[#allocation9 + $0x20] sm:$0xff] %v714
          %773 = vst [vmem:[#allocation9 + $0x28] sm:$0xff] %v717
          %774 = vst [vmem:[#allocation9 + $0x30] sm:$0xff] %v722
          %775 = vst [vmem:[#allocation9 + $0x38] sm:$0xff] %v725
        $region60: #{tpu_custom_call.1} parent=35 // pred_fallthru
          _
        // Predicated region
        $region61: #{tpu_custom_call.1} parent=35 // pred_check
          %p776 = pneg %p125
        $region62: #{tpu_custom_call.1} parent=35 // pred_check_branch
          %778 = sbr.rel (%p776) target = $region64
        $region63: #{tpu_custom_call.1} parent=35 // pred_region
          %s780 = ssub.s32 1024, 1024
          %781 = vsyncadd [#allocation5], %s780
          %s782 = sshll.u32 [#allocation9], 4
          %s783 = int_to_ptr.vmem [resolvable:$true] %s782
          %788 = dma.vmem_to_hbm [thread:$0]  %s783, 1024, %s4, [#allocation5], 128, 128, 8
        $region64: #{tpu_custom_call.1} parent=35 // pred_fallthru
          _
        // Predicated region
        $region65: #{tpu_custom_call.1} parent=35 // pred_check
          %p789 = pneg %p125
        $region66: #{tpu_custom_call.1} parent=35 // pred_check_branch
          %791 = sbr.rel (%p789) target = $region68
        $region67: #{tpu_custom_call.1} parent=35 // pred_region
          %792 = dma.done [#allocation5], 1024
        $region68: #{tpu_custom_call.1} parent=35 // pred_fallthru
          _
      $region36: #{tpu_custom_call.1} parent=5 // pred_fallthru
        _
      %p793 = scmp.le.s32.totalorder 2, %s13
      // Predicated region
      $region69: #{tpu_custom_call.1} parent=5 // pred_check
        %p794 = pneg %p793
      $region70: #{tpu_custom_call.1} parent=5 // pred_check_branch
        %796 = sbr.rel (%p794) target = $region72
      $region71: #{tpu_custom_call.1} parent=5 // pred_region
        %s797 = ssub.s32 %s13, 2
      $region72: #{tpu_custom_call.1} parent=5 // pred_fallthru
        _
    $region6: #{tpu_custom_call.1} parent=1 // loop_footer
      %s17 = sadd.s32 1, %s13
    $region7: #{tpu_custom_call.1} parent=1 // loop_footer_branch
      %12 = sbr.rel target = $region3
    $region8: #{tpu_custom_call.1} parent=1 // loop_exit
      _
    %798 = vsyncpa [#allocation4], 1
    %s799 = scalar_lea.sflag [#allocation4], 1
    %800 = vsyncpa %s799, 1
    %801 = vsyncpa [#allocation7], 1
    %802 = vsyncpa [#allocation5], 1
    %s803 = scalar_lea.sflag [#allocation5], 1
    %804 = vsyncpa %s803, 1

</llo_original>
